<compile_context>
chip_gen: v7x
topology: tpu7x:2x2x1
jax: 0.10.0
libtpu: 0.0.40
codegen_flags: <defaults>
</compile_context>

<pallas_src>
import math
import functools

import jax
import jax.numpy as jnp
from jax.experimental import pallas as pl
from jax.experimental.pallas import tpu as pltpu


# ----------------------------- Pallas kernel --------------------------------


def _cross_attention_kernel(x_ref, agg_ref, wqv_ref, bqv_ref, wk_ref, bk_ref,
                            gate_ref, o_ref, *, q_out, v_out):
    # x_ref   : (TILE_N, C_in)           current point tile  (B*N flattened)
    # agg_ref : (TILE_N, S1*K_in)        all scales' aggregated keys, concatenated
    # wqv/bqv : (C_in, q_out+v_out), (1, q_out+v_out)  fused Q|V projection
    # wk/bk   : (S1*K_in, k_out), (1, k_out)           scale-collapsed K projection
    # gate_ref: (q_out, v_out)           block-diagonal per-head matrix, entries
    #                                    1/sqrt(D) where head(q_chan)==head(v_chan)
    x = x_ref[...]                                                # (TILE_N, C_in)

    # One fused projection for Q and V (single wide MXU push), then slice.
    qv = jnp.dot(x, wqv_ref[...], preferred_element_type=jnp.float32) + bqv_ref[...]
    q = qv[:, :q_out]                                             # (TILE_N, q_out)
    v = qv[:, q_out:q_out + v_out]                                # (TILE_N, v_out)

    # One matmul for the summed multi-scale key projection.
    k = jnp.dot(agg_ref[...], wk_ref[...],
                preferred_element_type=jnp.float32) + bk_ref[...]  # (TILE_N, k_out)

    # gate[:, c'] = attn_{head(c')} : per-head dot product, scaled by 1/sqrt(D),
    # broadcast back to channels — all in a single (TILE_N,q_out)x(q_out,v_out) matmul.
    gate = jnp.dot(q * k, gate_ref[...], preferred_element_type=jnp.float32)

    o_ref[...] = (v * gate).astype(o_ref.dtype)


def cross_attention_ms_onek(pcd, agg_neighbors, params, *, num_heads, tile_n=256):
    """pcd: (B, N, q_in); agg_neighbors: (S+1, B, N, k_in)."""
    B, N, C_IN = pcd.shape
    S1 = agg_neighbors.shape[0]
    K_IN = agg_neighbors.shape[-1]
    wqT, bq, wkT, bk, wvT, bv = params
    Q_OUT = wqT.shape[1]
    K_OUT = wkT.shape[2]
    V_OUT = wvT.shape[1]
    D = Q_OUT // num_heads

    BN = B * N
    tile_n = min(tile_n, BN)
    assert BN % tile_n == 0, f"B*N={BN} must be divisible by tile_n={tile_n}"

    # ---- wrapper-side (free / one-off) repacking -----------------------------
    x2d = pcd.reshape(BN, C_IN)                                   # contiguous view
    # (S1, B, N, K_IN) -> (B, N, S1, K_IN) -> (BN, S1*K_IN): scale-major columns.
    agg_cat = jnp.transpose(agg_neighbors, (1, 2, 0, 3)).reshape(BN, S1 * K_IN)

    wqv = jnp.concatenate([wqT, wvT], axis=1)                     # (C_IN, Q_OUT+V_OUT)
    bqv = jnp.concatenate([bq, bv], axis=1)                       # (1,    Q_OUT+V_OUT)
    wk_cat = wkT.reshape(S1 * K_IN, K_OUT)                        # (S1*K_IN, K_OUT)
    bk_sum = jnp.sum(bk, axis=0)                                  # (1, K_OUT)

    # Constant block-diagonal per-head gate matrix (scale folded in).
    inv_sqrt_d = 1.0 / math.sqrt(D)
    head_q = jnp.arange(Q_OUT) // D
    head_v = jnp.arange(V_OUT) // D
    gate_mat = jnp.where(head_q[:, None] == head_v[None, :],
                         inv_sqrt_d, 0.0).astype(jnp.float32)     # (Q_OUT, V_OUT)

    kernel = functools.partial(_cross_attention_kernel, q_out=Q_OUT, v_out=V_OUT)
    grid = (BN // tile_n,)

    out = pl.pallas_call(
        kernel,
        out_shape=jax.ShapeDtypeStruct((BN, V_OUT), jnp.float32),
        grid_spec=pltpu.PrefetchScalarGridSpec(
            num_scalar_prefetch=0,
            grid=grid,
            in_specs=[
                pl.BlockSpec((tile_n, C_IN), lambda i: (i, 0)),
                pl.BlockSpec((tile_n, S1 * K_IN), lambda i: (i, 0)),
                pl.BlockSpec((C_IN, Q_OUT + V_OUT), lambda i: (0, 0)),
                pl.BlockSpec((1, Q_OUT + V_OUT), lambda i: (0, 0)),
                pl.BlockSpec((S1 * K_IN, K_OUT), lambda i: (0, 0)),
                pl.BlockSpec((1, K_OUT), lambda i: (0, 0)),
                pl.BlockSpec((Q_OUT, V_OUT), lambda i: (0, 0)),
            ],
            out_specs=pl.BlockSpec((tile_n, V_OUT), lambda i: (i, 0)),
        ),
        compiler_params=pltpu.CompilerParams(
            dimension_semantics=("parallel",)),
    )(x2d, agg_cat, wqv, bqv, wk_cat, bk_sum, gate_mat)

    return out.reshape(B, N, V_OUT)


# ------------------------------ JAX glue -------------------------------------


def select_neighbors_in_one_key(pcd, coordinate, K, scale):
    """Plain-JAX stand-in for ops.select_neighbors_in_one_key.

    For each scale s, gathers K*(s+1) nearest neighbors (euclidean on
    `coordinate`) and max-pools their features into one aggregated key per
    point. Returns (scale+1, B, N, C)."""
    # TODO(synk): exact semantics of the external ops.select_neighbors_in_one_key
    # (neighbor_selection_method / neighbor_type / group_type) are not in the
    # module source; a kNN + max-pool aggregation is used here.
    d2 = jnp.sum((coordinate[:, :, None, :] - coordinate[:, None, :, :]) ** 2,
                 axis=-1)                                         # (B, N, N)
    outs = []
    for s in range(scale + 1):
        k_s = K * (s + 1)
        _, idx = jax.lax.top_k(-d2, k_s)                          # (B, N, k_s)
        gathered = jax.vmap(lambda feat, ind: feat[ind])(pcd, idx)  # (B,N,k_s,C)
        outs.append(jnp.max(gathered, axis=2))                    # (B, N, C)
    return jnp.stack(outs, axis=0)


def init_params(key, q_in, q_out, k_in, k_out, v_in, v_out, scale):
    """Deterministic PyTorch-style Linear init (U(-1/sqrt(fan_in), 1/sqrt(fan_in)))."""
    def linear(k, fin, fout):
        kw, kb = jax.random.split(k)
        bound = 1.0 / math.sqrt(fin)
        w = jax.random.uniform(kw, (fout, fin), jnp.float32, -bound, bound)
        b = jax.random.uniform(kb, (fout,), jnp.float32, -bound, bound)
        return w, b

    keys = jax.random.split(key, scale + 3)
    wq, bq = linear(keys[0], q_in, q_out)
    wv, bv = linear(keys[1], v_in, v_out)
    wks, bks = zip(*[linear(keys[2 + i], k_in, k_out) for i in range(scale + 1)])
    wkT = jnp.stack([w.T for w in wks], axis=0)                   # (S+1, k_in, k_out)
    bk = jnp.stack(bks, axis=0)[:, None, :]                       # (S+1, 1, k_out)
    return (wq.T, bq[None, :], wkT, bk, wv.T, bv[None, :])


def reference(pcd, agg, params, num_heads):
    """Pure-JAX reference matching the kernel semantics."""
    wqT, bq, wkT, bk, wvT, bv = params
    B, N, _ = pcd.shape
    D = wqT.shape[1] // num_heads
    q = (pcd @ wqT + bq).reshape(B, N, num_heads, D)
    v = (pcd @ wvT + bv).reshape(B, N, num_heads, D)
    attn = jnp.zeros((B, N, num_heads, 1), jnp.float32)
    for s in range(agg.shape[0]):
        k = (agg[s] @ wkT[s] + bk[s]).reshape(B, N, num_heads, D)
        attn = attn + jnp.sum(q * k, axis=-1, keepdims=True) / math.sqrt(D)
    return (attn * v).reshape(B, N, num_heads * D)


# -------------------------------- main ---------------------------------------


if __name__ == "__main__":
    B, N = 2, 256                      # B*N = 512 -> grid of 2 tiles of 256 points
    q_in = q_out = k_in = k_out = v_in = v_out = 32
    num_heads, scale, K = 4, 2, 4

    key = jax.random.PRNGKey(0)
    kx, kc, kp = jax.random.split(key, 3)
    pcd = jax.random.normal(kx, (B, N, q_in), jnp.float32)
    coordinate = jax.random.normal(kc, (B, N, 3), jnp.float32)
    params = init_params(kp, q_in, q_out, k_in, k_out, v_in, v_out, scale)

    agg = select_neighbors_in_one_key(pcd, coordinate, K, scale)  # (3, B, N, k_in)

    out = cross_attention_ms_onek(pcd, agg, params, num_heads=num_heads, tile_n=256)
    out = jax.block_until_ready(out)

    ref = reference(pcd, agg, params, num_heads)
    assert out.shape == (B, N, v_out), out.shape
    assert jnp.allclose(out, ref, atol=1e-4, rtol=1e-4), "mismatch vs reference"
    print("KERNEL_OK")
</pallas_src>

<mosaic_0001>
module attributes {stable_mosaic.version = 11 : i64} {
  func.func @_cross_attention_kernel(%arg0: i32, %arg1: memref<256x32xf32, #tpu.memory_space<vmem>>, %arg2: memref<256x96xf32, #tpu.memory_space<vmem>>, %arg3: memref<32x64xf32, #tpu.memory_space<vmem>>, %arg4: memref<1x64xf32, #tpu.memory_space<vmem>>, %arg5: memref<96x32xf32, #tpu.memory_space<vmem>>, %arg6: memref<1x32xf32, #tpu.memory_space<vmem>>, %arg7: memref<32x32xf32, #tpu.memory_space<vmem>>, %arg8: memref<256x32xf32, #tpu.memory_space<vmem>>) attributes {dimension_semantics = [#tpu.dimension_semantics<parallel>], iteration_bounds = array<i64: 2>, scalar_prefetch = 0 : i64, scratch_operands = 0 : i64, tpu.core_type = #tpu.core_type<tc>, window_params = [{transform_indices = @transform_0, window_bounds = array<i64: 256, 32>}, {transform_indices = @transform_1, window_bounds = array<i64: 256, 96>}, {pipeline_mode = #tpu.pipeline_mode<synchronous>, transform_indices = @transform_2, window_bounds = array<i64: 32, 64>}, {pipeline_mode = #tpu.pipeline_mode<synchronous>, transform_indices = @transform_3, window_bounds = array<i64: 1, 64>}, {pipeline_mode = #tpu.pipeline_mode<synchronous>, transform_indices = @transform_4, window_bounds = array<i64: 96, 32>}, {pipeline_mode = #tpu.pipeline_mode<synchronous>, transform_indices = @transform_5, window_bounds = array<i64: 1, 32>}, {pipeline_mode = #tpu.pipeline_mode<synchronous>, transform_indices = @transform_6, window_bounds = array<i64: 32, 32>}, {transform_indices = @transform_7, window_bounds = array<i64: 256, 32>}]} {
    %c0 = arith.constant 0 : index
    %c0_0 = arith.constant 0 : index
    %0 = vector.load %arg1[%c0, %c0_0] : memref<256x32xf32, #tpu.memory_space<vmem>>, vector<256x32xf32>
    %c0_1 = arith.constant 0 : index
    %c0_2 = arith.constant 0 : index
    %1 = vector.load %arg3[%c0_1, %c0_2] : memref<32x64xf32, #tpu.memory_space<vmem>>, vector<32x64xf32>
    %cst = arith.constant dense<0.000000e+00> : vector<256x64xf32>
    %2 = tpu.matmul %0, %1, %cst {dimension_numbers = #tpu.dot_dimension_numbers<[1], [0], [0], [1], [0, 0, 1, 1], [], []>} : vector<256x32xf32>, vector<32x64xf32>, vector<256x64xf32> -> vector<256x64xf32>
    %c0_3 = arith.constant 0 : index
    %c0_4 = arith.constant 0 : index
    %3 = vector.load %arg4[%c0_3, %c0_4] : memref<1x64xf32, #tpu.memory_space<vmem>>, vector<1x64xf32>
    %4 = vector.broadcast %3 : vector<1x64xf32> to vector<256x64xf32>
    %5 = arith.addf %2, %4 : vector<256x64xf32>
    %6 = vector.extract_strided_slice %5 {offsets = [0, 0], sizes = [256, 32], strides = [1, 1]} : vector<256x64xf32> to vector<256x32xf32>
    %7 = vector.extract_strided_slice %5 {offsets = [0, 32], sizes = [256, 32], strides = [1, 1]} : vector<256x64xf32> to vector<256x32xf32>
    %c0_5 = arith.constant 0 : index
    %c0_6 = arith.constant 0 : index
    %8 = vector.load %arg2[%c0_5, %c0_6] : memref<256x96xf32, #tpu.memory_space<vmem>>, vector<256x96xf32>
    %c0_7 = arith.constant 0 : index
    %c0_8 = arith.constant 0 : index
    %9 = vector.load %arg5[%c0_7, %c0_8] : memref<96x32xf32, #tpu.memory_space<vmem>>, vector<96x32xf32>
    %cst_9 = arith.constant dense<0.000000e+00> : vector<256x32xf32>
    %10 = tpu.matmul %8, %9, %cst_9 {dimension_numbers = #tpu.dot_dimension_numbers<[1], [0], [0], [1], [0, 0, 1, 1], [], []>} : vector<256x96xf32>, vector<96x32xf32>, vector<256x32xf32> -> vector<256x32xf32>
    %c0_10 = arith.constant 0 : index
    %c0_11 = arith.constant 0 : index
    %11 = vector.load %arg6[%c0_10, %c0_11] : memref<1x32xf32, #tpu.memory_space<vmem>>, vector<1x32xf32>
    %12 = vector.broadcast %11 : vector<1x32xf32> to vector<256x32xf32>
    %13 = arith.addf %10, %12 : vector<256x32xf32>
    %14 = arith.mulf %6, %13 : vector<256x32xf32>
    %c0_12 = arith.constant 0 : index
    %c0_13 = arith.constant 0 : index
    %15 = vector.load %arg7[%c0_12, %c0_13] : memref<32x32xf32, #tpu.memory_space<vmem>>, vector<32x32xf32>
    %cst_14 = arith.constant dense<0.000000e+00> : vector<256x32xf32>
    %16 = tpu.matmul %14, %15, %cst_14 {dimension_numbers = #tpu.dot_dimension_numbers<[1], [0], [0], [1], [0, 0, 1, 1], [], []>} : vector<256x32xf32>, vector<32x32xf32>, vector<256x32xf32> -> vector<256x32xf32>
    %17 = arith.mulf %7, %16 : vector<256x32xf32>
    %c0_15 = arith.constant 0 : index
    %c0_16 = arith.constant 0 : index
    %18 = vector.load %arg8[%c0_15, %c0_16] : memref<256x32xf32, #tpu.memory_space<vmem>>, vector<256x32xf32>
    tpu.vector_store %arg8[%c0_15, %c0_16], %17 {strides = array<i32>} : memref<256x32xf32, #tpu.memory_space<vmem>>, vector<256x32xf32>,
    return
  }
  func.func @transform_0(%arg0: i32) -> (i32, i32) {
    %c0_i32 = arith.constant 0 : i32
    %c0_i32_0 = arith.constant 0 : i32
    return %arg0, %c0_i32 : i32, i32
  }
  func.func @transform_1(%arg0: i32) -> (i32, i32) {
    %c0_i32 = arith.constant 0 : i32
    %c0_i32_0 = arith.constant 0 : i32
    return %arg0, %c0_i32 : i32, i32
  }
  func.func @transform_2(%arg0: i32) -> (i32, i32) {
    %c0_i32 = arith.constant 0 : i32
    %c0_i32_0 = arith.constant 0 : i32
    %c0_i32_1 = arith.constant 0 : i32
    return %c0_i32, %c0_i32_0 : i32, i32
  }
  func.func @transform_3(%arg0: i32) -> (i32, i32) {
    %c0_i32 = arith.constant 0 : i32
    %c0_i32_0 = arith.constant 0 : i32
    %c0_i32_1 = arith.constant 0 : i32
    return %c0_i32, %c0_i32_0 : i32, i32
  }
  func.func @transform_4(%arg0: i32) -> (i32, i32) {
    %c0_i32 = arith.constant 0 : i32
    %c0_i32_0 = arith.constant 0 : i32
    %c0_i32_1 = arith.constant 0 : i32
    return %c0_i32, %c0_i32_0 : i32, i32
  }
  func.func @transform_5(%arg0: i32) -> (i32, i32) {
    %c0_i32 = arith.constant 0 : i32
    %c0_i32_0 = arith.constant 0 : i32
    %c0_i32_1 = arith.constant 0 : i32
    return %c0_i32, %c0_i32_0 : i32, i32
  }
  func.func @transform_6(%arg0: i32) -> (i32, i32) {
    %c0_i32 = arith.constant 0 : i32
    %c0_i32_0 = arith.constant 0 : i32
    %c0_i32_1 = arith.constant 0 : i32
    return %c0_i32, %c0_i32_0 : i32, i32
  }
  func.func @transform_7(%arg0: i32) -> (i32, i32) {
    %c0_i32 = arith.constant 0 : i32
    %c0_i32_0 = arith.constant 0 : i32
    return %arg0, %c0_i32 : i32, i32
  }
}

</mosaic_0001>

<llo_original>
// kernel: tpu_custom_call.1
$region0: #{tpu_custom_call.1}
  #allocation0 [shape = 'u32[]', space=smem, size = 0x4, offset = 0x4, fixed_abs, tag = 'smem constant byte address 0x4 - core index']
  #allocation1 [shape = 'u32[144,128]{1,0:T(1,128)}', space=vmem, size = 0x12000, scoped, tag = 'internal scratch']
  %s0 = inlined_call_operand.vmem [shape: f32[512,32], index: 0, kind: input, shape index: {}]
  %s1 = inlined_call_operand.vmem [shape: f32[512,96], index: 1, kind: input, shape index: {}]
  %s2 = inlined_call_operand.vmem [shape: f32[32,64], index: 2, kind: input, shape index: {}]
  %s3 = inlined_call_operand.vmem [shape: f32[1,64], index: 3, kind: input, shape index: {}]
  %s4 = inlined_call_operand.vmem [shape: f32[96,32], index: 4, kind: input, shape index: {}]
  %s5 = inlined_call_operand.vmem [shape: f32[1,32], index: 5, kind: input, shape index: {}]
  %s6 = inlined_call_operand.vmem [shape: f32[32,32], index: 6, kind: input, shape index: {}]
  %s7 = inlined_call_operand.vmem [shape: f32[512,32], index: 7, kind: output, shape index: {}]
  %s8 = sld [smem:[#allocation0]]
  $region61: #{tpu_custom_call.1} parent=0
    _
  %s10 = ssub.s32 1, %s8
  %s11 = scalar_select 0, %s10, %s8
  loop: start=0, step=1, limit=4
  $region2: #{tpu_custom_call.1} parent=0 // loop_pre_header
    _
  $region3: #{tpu_custom_call.1} parent=0 // loop_header
    %s13 = sphi 0, %s17
    %p14 = scmp.ge.s32.totalorder %s13, 4
    %s23 = sphi 0, %s25
    %s26 = sphi 0, %s23
    %s27 = sphi 0, %s26
    %s43 = sphi 0, %s27
    %s49 = sphi 0, %s51
    %s52 = sphi 0, %s49
    %s53 = sphi 0, %s52
    %s69 = sphi 0, %s53
    %s73 = sphi 0, %s73
    %s75 = sphi 0, %s73
    %s76 = sphi 0, %s75
    %s90 = sphi 0, %s76
    %s94 = sphi 0, %s94
    %s96 = sphi 0, %s94
    %s97 = sphi 0, %s96
    %s111 = sphi 0, %s97
    %s115 = sphi 0, %s115
    %s117 = sphi 0, %s115
    %s118 = sphi 0, %s117
    %s132 = sphi 0, %s118
    %s136 = sphi 0, %s136
    %s138 = sphi 0, %s136
    %s139 = sphi 0, %s138
    %s153 = sphi 0, %s139
    %s157 = sphi 0, %s157
    %s159 = sphi 0, %s157
    %s160 = sphi 0, %s159
    %s174 = sphi 0, %s160
    %s180 = sphi 0, %s182
    %s183 = sphi 0, %s180
    %s184 = sphi 0, %s183
    %s200 = sphi 0, %s184
  $region4: #{tpu_custom_call.1} parent=0 // loop_header_branch
    %16 = sbr.rel (%p14) target = $region8
  $region5: #{tpu_custom_call.1} parent=0 // loop_body
    %s18 = ssub.s32 %s13, 1
    %s19 = ssub.s32 %s13, 2
    %s20 = sadd.s32 %s13, 1
    %s21 = ssub.s32 %s13, %s20
    %p22 = scmp.eq.s32.totalorder %s21, 0
    %s24 = sadd.s32 %s23, 1
    %s25 = scalar_select %p22, %s23, %s24
    %p28 = pneg %p22
    %p29 = scmp.eq.s32.totalorder %s13, 1
    %p30 = por %p28, %p29
    %p31 = scmp.ne.s32.totalorder %s23, %s26
    %p32 = scmp.eq.s32.totalorder %s13, 0
    %p33 = por %p31, %p32
    %p34 = scmp.ne.s32.totalorder %s23, %s26
    %p35 = scmp.eq.s32.totalorder %s18, 1
    %p36 = por %p34, %p35
    %p37 = scmp.ne.s32.totalorder %s26, %s27
    %p38 = scmp.eq.s32.totalorder %s18, 0
    %p39 = por %p37, %p38
    %p40 = scmp.ne.s32.totalorder %s26, %s27
    %p41 = scmp.eq.s32.totalorder %s19, 1
    %p42 = por %p40, %p41
    %p44 = scmp.ne.s32.totalorder %s27, %s43
    %p45 = scmp.eq.s32.totalorder %s19, 0
    %p46 = por %p44, %p45
    %s47 = ssub.s32 %s13, %s20
    %p48 = scmp.eq.s32.totalorder %s47, 0
    %s50 = sadd.s32 %s49, 1
    %s51 = scalar_select %p48, %s49, %s50
    %p54 = pneg %p48
    %p55 = scmp.eq.s32.totalorder %s13, 1
    %p56 = por %p54, %p55
    %p57 = scmp.ne.s32.totalorder %s49, %s52
    %p58 = scmp.eq.s32.totalorder %s13, 0
    %p59 = por %p57, %p58
    %p60 = scmp.ne.s32.totalorder %s49, %s52
    %p61 = scmp.eq.s32.totalorder %s18, 1
    %p62 = por %p60, %p61
    %p63 = scmp.ne.s32.totalorder %s52, %s53
    %p64 = scmp.eq.s32.totalorder %s18, 0
    %p65 = por %p63, %p64
    %p66 = scmp.ne.s32.totalorder %s52, %s53
    %p67 = scmp.eq.s32.totalorder %s19, 1
    %p68 = por %p66, %p67
    %p70 = scmp.ne.s32.totalorder %s53, %s69
    %p71 = scmp.eq.s32.totalorder %s19, 0
    %p72 = por %p70, %p71
    %s74 = sadd.s32 %s73, 1
    %p77 = scmp.eq.s32.totalorder %s13, 1
    %p78 = scmp.ne.s32.totalorder %s73, %s75
    %p79 = scmp.eq.s32.totalorder %s13, 0
    %p80 = por %p78, %p79
    %p81 = scmp.ne.s32.totalorder %s73, %s75
    %p82 = scmp.eq.s32.totalorder %s18, 1
    %p83 = por %p81, %p82
    %p84 = scmp.ne.s32.totalorder %s75, %s76
    %p85 = scmp.eq.s32.totalorder %s18, 0
    %p86 = por %p84, %p85
    %p87 = scmp.ne.s32.totalorder %s75, %s76
    %p88 = scmp.eq.s32.totalorder %s19, 1
    %p89 = por %p87, %p88
    %p91 = scmp.ne.s32.totalorder %s76, %s90
    %p92 = scmp.eq.s32.totalorder %s19, 0
    %p93 = por %p91, %p92
    %s95 = sadd.s32 %s94, 1
    %p98 = scmp.eq.s32.totalorder %s13, 1
    %p99 = scmp.ne.s32.totalorder %s94, %s96
    %p100 = scmp.eq.s32.totalorder %s13, 0
    %p101 = por %p99, %p100
    %p102 = scmp.ne.s32.totalorder %s94, %s96
    %p103 = scmp.eq.s32.totalorder %s18, 1
    %p104 = por %p102, %p103
    %p105 = scmp.ne.s32.totalorder %s96, %s97
    %p106 = scmp.eq.s32.totalorder %s18, 0
    %p107 = por %p105, %p106
    %p108 = scmp.ne.s32.totalorder %s96, %s97
    %p109 = scmp.eq.s32.totalorder %s19, 1
    %p110 = por %p108, %p109
    %p112 = scmp.ne.s32.totalorder %s97, %s111
    %p113 = scmp.eq.s32.totalorder %s19, 0
    %p114 = por %p112, %p113
    %s116 = sadd.s32 %s115, 1
    %p119 = scmp.eq.s32.totalorder %s13, 1
    %p120 = scmp.ne.s32.totalorder %s115, %s117
    %p121 = scmp.eq.s32.totalorder %s13, 0
    %p122 = por %p120, %p121
    %p123 = scmp.ne.s32.totalorder %s115, %s117
    %p124 = scmp.eq.s32.totalorder %s18, 1
    %p125 = por %p123, %p124
    %p126 = scmp.ne.s32.totalorder %s117, %s118
    %p127 = scmp.eq.s32.totalorder %s18, 0
    %p128 = por %p126, %p127
    %p129 = scmp.ne.s32.totalorder %s117, %s118
    %p130 = scmp.eq.s32.totalorder %s19, 1
    %p131 = por %p129, %p130
    %p133 = scmp.ne.s32.totalorder %s118, %s132
    %p134 = scmp.eq.s32.totalorder %s19, 0
    %p135 = por %p133, %p134
    %s137 = sadd.s32 %s136, 1
    %p140 = scmp.eq.s32.totalorder %s13, 1
    %p141 = scmp.ne.s32.totalorder %s136, %s138
    %p142 = scmp.eq.s32.totalorder %s13, 0
    %p143 = por %p141, %p142
    %p144 = scmp.ne.s32.totalorder %s136, %s138
    %p145 = scmp.eq.s32.totalorder %s18, 1
    %p146 = por %p144, %p145
    %p147 = scmp.ne.s32.totalorder %s138, %s139
    %p148 = scmp.eq.s32.totalorder %s18, 0
    %p149 = por %p147, %p148
    %p150 = scmp.ne.s32.totalorder %s138, %s139
    %p151 = scmp.eq.s32.totalorder %s19, 1
    %p152 = por %p150, %p151
    %p154 = scmp.ne.s32.totalorder %s139, %s153
    %p155 = scmp.eq.s32.totalorder %s19, 0
    %p156 = por %p154, %p155
    %s158 = sadd.s32 %s157, 1
    %p161 = scmp.eq.s32.totalorder %s13, 1
    %p162 = scmp.ne.s32.totalorder %s157, %s159
    %p163 = scmp.eq.s32.totalorder %s13, 0
    %p164 = por %p162, %p163
    %p165 = scmp.ne.s32.totalorder %s157, %s159
    %p166 = scmp.eq.s32.totalorder %s18, 1
    %p167 = por %p165, %p166
    %p168 = scmp.ne.s32.totalorder %s159, %s160
    %p169 = scmp.eq.s32.totalorder %s18, 0
    %p170 = por %p168, %p169
    %p171 = scmp.ne.s32.totalorder %s159, %s160
    %p172 = scmp.eq.s32.totalorder %s19, 1
    %p173 = por %p171, %p172
    %p175 = scmp.ne.s32.totalorder %s160, %s174
    %p176 = scmp.eq.s32.totalorder %s19, 0
    %p177 = por %p175, %p176
    %s178 = ssub.s32 %s13, %s20
    %p179 = scmp.eq.s32.totalorder %s178, 0
    %s181 = sadd.s32 %s180, 1
    %s182 = scalar_select %p179, %s180, %s181
    %p185 = pneg %p179
    %p186 = scmp.eq.s32.totalorder %s13, 1
    %p187 = por %p185, %p186
    %p188 = scmp.ne.s32.totalorder %s180, %s183
    %p189 = scmp.eq.s32.totalorder %s13, 0
    %p190 = por %p188, %p189
    %p191 = scmp.ne.s32.totalorder %s180, %s183
    %p192 = scmp.eq.s32.totalorder %s18, 1
    %p193 = por %p191, %p192
    %p194 = scmp.ne.s32.totalorder %s183, %s184
    %p195 = scmp.eq.s32.totalorder %s18, 0
    %p196 = por %p194, %p195
    %p197 = scmp.ne.s32.totalorder %s183, %s184
    %p198 = scmp.eq.s32.totalorder %s19, 1
    %p199 = por %p197, %p198
    %p201 = scmp.ne.s32.totalorder %s184, %s200
    %p202 = scmp.eq.s32.totalorder %s19, 0
    %p203 = por %p201, %p202
    %p204 = scmp.le.s32.totalorder 1, %s13
    %p205 = scmp.lt.s32.totalorder %s13, 3
    %p206 = pnand %p204, %p205
    %p207 = pneg %p206
    // Predicated region
    $region9: #{tpu_custom_call.1} parent=5 // pred_check
      _
    $region10: #{tpu_custom_call.1} parent=5 // pred_check_branch
      %209 = sbr.rel (%p206) target = $region12
    $region11: #{tpu_custom_call.1} parent=5 // pred_region
      %s210 = ssub.s32 %s13, 1
      // Predicated region
      $region13: #{tpu_custom_call.1} parent=11 // pred_check
        %p211 = pneg %p86
      $region14: #{tpu_custom_call.1} parent=11 // pred_check_branch
        %213 = sbr.rel (%p211) target = $region16
      $region15: #{tpu_custom_call.1} parent=11 // pred_region
        _
      $region16: #{tpu_custom_call.1} parent=11 // pred_fallthru
        _
      // Predicated region
      $region17: #{tpu_custom_call.1} parent=11 // pred_check
        %p214 = pneg %p107
      $region18: #{tpu_custom_call.1} parent=11 // pred_check_branch
        %216 = sbr.rel (%p214) target = $region20
      $region19: #{tpu_custom_call.1} parent=11 // pred_region
        _
      $region20: #{tpu_custom_call.1} parent=11 // pred_fallthru
        _
      // Predicated region
      $region21: #{tpu_custom_call.1} parent=11 // pred_check
        %p217 = pneg %p128
      $region22: #{tpu_custom_call.1} parent=11 // pred_check_branch
        %219 = sbr.rel (%p217) target = $region24
      $region23: #{tpu_custom_call.1} parent=11 // pred_region
        _
      $region24: #{tpu_custom_call.1} parent=11 // pred_fallthru
        _
      // Predicated region
      $region25: #{tpu_custom_call.1} parent=11 // pred_check
        %p220 = pneg %p149
      $region26: #{tpu_custom_call.1} parent=11 // pred_check_branch
        %222 = sbr.rel (%p220) target = $region28
      $region27: #{tpu_custom_call.1} parent=11 // pred_region
        _
      $region28: #{tpu_custom_call.1} parent=11 // pred_fallthru
        _
      // Predicated region
      $region29: #{tpu_custom_call.1} parent=11 // pred_check
        %p223 = pneg %p170
      $region30: #{tpu_custom_call.1} parent=11 // pred_check_branch
        %225 = sbr.rel (%p223) target = $region32
      $region31: #{tpu_custom_call.1} parent=11 // pred_region
        _
      $region32: #{tpu_custom_call.1} parent=11 // pred_fallthru
        _
    $region12: #{tpu_custom_call.1} parent=5 // pred_fallthru
      _
    %p226 = scmp.lt.s32.totalorder %s13, 2
    // Predicated region
    $region33: #{tpu_custom_call.1} parent=5 // pred_check
      %p227 = pneg %p226
    $region34: #{tpu_custom_call.1} parent=5 // pred_check_branch
      %229 = sbr.rel (%p227) target = $region36
    $region35: #{tpu_custom_call.1} parent=5 // pred_region
      // Predicated region
      $region37: #{tpu_custom_call.1} parent=35 // pred_check
        %p230 = pneg %p33
      $region38: #{tpu_custom_call.1} parent=35 // pred_check_branch
        %232 = sbr.rel (%p230) target = $region40
      $region39: #{tpu_custom_call.1} parent=35 // pred_region
        %s233 = smul.u32 32, %s13
        %p234 = scmp.lt.s32.totalorder %s233, 63
        %s235 = scalar_select %p234, %s233, 63
        %s236 = smul.addr %s235, 8
        %s237 = scalar_lea.vmem %s0, %s236
        %s238 = smul.u32 32, %s13
      $region40: #{tpu_custom_call.1} parent=35 // pred_fallthru
        _
      // Predicated region
      $region41: #{tpu_custom_call.1} parent=35 // pred_check
        %p239 = pneg %p59
      $region42: #{tpu_custom_call.1} parent=35 // pred_check_branch
        %241 = sbr.rel (%p239) target = $region44
      $region43: #{tpu_custom_call.1} parent=35 // pred_region
        %s242 = smul.u32 32, %s13
        %p243 = scmp.lt.s32.totalorder %s242, 63
        %s244 = scalar_select %p243, %s242, 63
        %s245 = smul.addr %s244, 8
        %s246 = scalar_lea.vmem %s1, %s245
        %s247 = smul.u32 32, %s13
      $region44: #{tpu_custom_call.1} parent=35 // pred_fallthru
        _
    $region36: #{tpu_custom_call.1} parent=5 // pred_fallthru
      _
    %p248 = scmp.le.s32.totalorder 1, %s13
    %p249 = scmp.lt.s32.totalorder %s13, 3
    %p250 = pnand %p248, %p249
    %p251 = pneg %p250
    // Predicated region
    $region45: #{tpu_custom_call.1} parent=5 // pred_check
      _
    $region46: #{tpu_custom_call.1} parent=5 // pred_check_branch
      %253 = sbr.rel (%p250) target = $region48
    $region47: #{tpu_custom_call.1} parent=5 // pred_region
      %s254 = ssub.s32 %s13, 1
      %s255 = smul.u32 32, %s18
      %p256 = scmp.lt.s32.totalorder %s255, 63
      %s257 = scalar_select %p256, %s255, 63
      %s258 = smul.addr %s257, 8
      %s259 = scalar_lea.vmem %s0, %s258
      %p260 = pneg %p39
      %p261 = pneg %p36
      %s262 = smul.u32 32, %s18
      %p263 = scmp.lt.s32.totalorder %s262, 63
      %s264 = scalar_select %p263, %s262, 63
      %s265 = smul.addr %s264, 8
      %s266 = scalar_lea.vmem %s1, %s265
      %p267 = pneg %p65
      %p268 = pneg %p62
      %p269 = pneg %p86
      %p270 = pneg %p83
      %p271 = pneg %p107
      %p272 = pneg %p104
      %p273 = pneg %p128
      %p274 = pneg %p125
      %p275 = pneg %p149
      %p276 = pneg %p146
      %p277 = pneg %p170
      %p278 = pneg %p167
      %p279 = pneg %p196
      %p280 = pneg %p193
      %s281 = smul.u32 32, %s18
      %p282 = scmp.lt.s32.totalorder %s281, 63
      %s283 = scalar_select %p282, %s281, 63
      %s284 = smul.addr %s283, 8
      %s285 = scalar_lea.vmem %s7, %s284
      %s286 = smul.u32 32, %s18
      %p287 = scmp.lt.s32.totalorder %s286, 63
      %s288 = scalar_select %p287, %s286, 63
      %s289 = smul.addr %s288, 8
      %s290 = scalar_lea.vmem %s0, %s289
      %s291 = smul.u32 32, %s18
      %s292 = smul.u32 32, %s18
      %p293 = scmp.lt.s32.totalorder %s292, 63
      %s294 = scalar_select %p293, %s292, 63
      %s295 = smul.addr %s294, 8
      %s296 = scalar_lea.vmem %s1, %s295
      %s297 = smul.u32 32, %s18
      %s298 = smul.u32 32, %s18
      %p299 = scmp.lt.s32.totalorder %s298, 63
      %s300 = scalar_select %p299, %s298, 63
      %s301 = smul.addr %s300, 8
      %s302 = scalar_lea.vmem %s7, %s301
      %s303 = smul.u32 32, %s18
      %v304 = vld [vmem:[%s290] sm:$0xff]
      %v305 = vld [vmem:[%s290 + $0x8] sm:$0xff]
      %v306 = vld [vmem:[%s290 + $0x10] sm:$0xff]
      %v307 = vld [vmem:[%s290 + $0x18] sm:$0xff]
      %v308 = vld [vmem:[%s290 + $0x20] sm:$0xff]
      %v309 = vld [vmem:[%s290 + $0x28] sm:$0xff]
      %v310 = vld [vmem:[%s290 + $0x30] sm:$0xff]
      %v311 = vld [vmem:[%s290 + $0x38] sm:$0xff]
      %v312 = vld [vmem:[%s290 + $0x40] sm:$0xff]
      %v313 = vld [vmem:[%s290 + $0x48] sm:$0xff]
      %v314 = vld [vmem:[%s290 + $0x50] sm:$0xff]
      %v315 = vld [vmem:[%s290 + $0x58] sm:$0xff]
      %v316 = vld [vmem:[%s290 + $0x60] sm:$0xff]
      %v317 = vld [vmem:[%s290 + $0x68] sm:$0xff]
      %v318 = vld [vmem:[%s290 + $0x70] sm:$0xff]
      %v319 = vld [vmem:[%s290 + $0x78] sm:$0xff]
      %v320 = vld [vmem:[%s290 + $0x80] sm:$0xff]
      %v321 = vld [vmem:[%s290 + $0x88] sm:$0xff]
      %v322 = vld [vmem:[%s290 + $0x90] sm:$0xff]
      %v323 = vld [vmem:[%s290 + $0x98] sm:$0xff]
      %v324 = vld [vmem:[%s290 + $0xa0] sm:$0xff]
      %v325 = vld [vmem:[%s290 + $0xa8] sm:$0xff]
      %v326 = vld [vmem:[%s290 + $0xb0] sm:$0xff]
      %v327 = vld [vmem:[%s290 + $0xb8] sm:$0xff]
      %v328 = vld [vmem:[%s290 + $0xc0] sm:$0xff]
      %v329 = vld [vmem:[%s290 + $0xc8] sm:$0xff]
      %v330 = vld [vmem:[%s290 + $0xd0] sm:$0xff]
      %v331 = vld [vmem:[%s290 + $0xd8] sm:$0xff]
      %v332 = vld [vmem:[%s290 + $0xe0] sm:$0xff]
      %v333 = vld [vmem:[%s290 + $0xe8] sm:$0xff]
      %v334 = vld [vmem:[%s290 + $0xf0] sm:$0xff]
      %v335 = vld [vmem:[%s290 + $0xf8] sm:$0xff]
      %v336 = vld [vmem:[%s2] sm:$0xff]
      %v337 = vld [vmem:[%s2 + $0x8] sm:$0xff]
      %v338 = vld [vmem:[%s2 + $0x10] sm:$0xff]
      %v339 = vld [vmem:[%s2 + $0x18] sm:$0xff]
      %v340 = vld [vmem:[%s3] sm:$0x1]
      %v342 = vlaneseq
      %v343 = vshrl.u32 %v342, 7
      %v344 = vsub.s32 0, %v343
      %v345 = vrot.slane %v340, %v344
      %vm347 = vcmask 261120
      %v349 = vsel %vm347, %v304, 0
      %v352 = vsel %vm347, %v305, 0
      %v355 = vsel %vm347, %v306, 0
      %v358 = vsel %vm347, %v307, 0
      %v361 = vsel %vm347, %v308, 0
      %v364 = vsel %vm347, %v309, 0
      %v367 = vsel %vm347, %v310, 0
      %v370 = vsel %vm347, %v311, 0
      %v373 = vsel %vm347, %v312, 0
      %v376 = vsel %vm347, %v313, 0
      %v379 = vsel %vm347, %v314, 0
      %v382 = vsel %vm347, %v315, 0
      %v385 = vsel %vm347, %v316, 0
      %v388 = vsel %vm347, %v317, 0
      %v391 = vsel %vm347, %v318, 0
      %v394 = vsel %vm347, %v319, 0
      %v397 = vsel %vm347, %v320, 0
      %v400 = vsel %vm347, %v321, 0
      %v403 = vsel %vm347, %v322, 0
      %v406 = vsel %vm347, %v323, 0
      %v409 = vsel %vm347, %v324, 0
      %v412 = vsel %vm347, %v325, 0
      %v415 = vsel %vm347, %v326, 0
      %v418 = vsel %vm347, %v327, 0
      %v421 = vsel %vm347, %v328, 0
      %v424 = vsel %vm347, %v329, 0
      %v427 = vsel %vm347, %v330, 0
      %v430 = vsel %vm347, %v331, 0
      %v433 = vsel %vm347, %v332, 0
      %v436 = vsel %vm347, %v333, 0
      %v439 = vsel %vm347, %v334, 0
      %v442 = vsel %vm347, %v335, 0
      %444 = vmatprep.subr.mxu0 0.0
      %445 = vmatpush1.msra.mxu0 %v336
      %446 = vmatprep.subr.mxu0 0.0
      %447 = vmatpush1.msra.mxu0 %v337
      %448 = vmatprep.subr.mxu0 0.0
      %449 = vmatpush1.msra.mxu0 %v338
      %450 = vmatprep.subr.mxu0 0.0
      %451 = vmatpush1.msra.mxu0 %v339
      %452 = vmatprep.subr.mxu0 0.0
      %453 = vmatpush1.msra.mxu0 0.0
      %454 = vmatprep.subr.mxu0 0.0
      %455 = vmatpush1.msra.mxu0 0.0
      %456 = vmatprep.subr.mxu0 0.0
      %457 = vmatpush1.msra.mxu0 0.0
      %458 = vmatprep.subr.mxu0 0.0
      %459 = vmatpush1.msra.mxu0 0.0
      %460 = vmatprep.subr.mxu0 0.0
      %461 = vmatpush1.msra.mxu0 0.0
      %462 = vmatprep.subr.mxu0 0.0
      %463 = vmatpush1.msra.mxu0 0.0
      %464 = vmatprep.subr.mxu0 0.0
      %465 = vmatpush1.msra.mxu0 0.0
      %466 = vmatprep.subr.mxu0 0.0
      %467 = vmatpush1.msra.mxu0 0.0
      %468 = vmatprep.subr.mxu0 0.0
      %469 = vmatpush1.msra.mxu0 0.0
      %470 = vmatprep.subr.mxu0 0.0
      %471 = vmatpush1.msra.mxu0 0.0
      %472 = vmatprep.subr.mxu0 0.0
      %473 = vmatpush1.msra.mxu0 0.0
      %474 = vmatprep.subr.mxu0 0.0
      %475 = vmatpush1.msra.mxu0 0.0
      %476 = vmatprep.subr.mxu0 0.0
      %477 = vmatpush1.msra.mxu0 0.0
      %478 = vmatprep.subr.mxu0 0.0
      %479 = vmatpush1.msra.mxu0 0.0
      %480 = vmatprep.subr.mxu0 0.0
      %481 = vmatpush1.msra.mxu0 0.0
      %482 = vmatprep.subr.mxu0 0.0
      %483 = vmatpush1.msra.mxu0 0.0
      %484 = vmatprep.subr.mxu0 0.0
      %485 = vmatpush1.msra.mxu0 0.0
      %486 = vmatprep.subr.mxu0 0.0
      %487 = vmatpush1.msra.mxu0 0.0
      %488 = vmatprep.subr.mxu0 0.0
      %489 = vmatpush1.msra.mxu0 0.0
      %490 = vmatprep.subr.mxu0 0.0
      %491 = vmatpush1.msra.mxu0 0.0
      %492 = vmatprep.subr.mxu0 0.0
      %493 = vmatpush1.msra.mxu0 0.0
      %494 = vmatprep.subr.mxu0 0.0
      %495 = vmatpush1.msra.mxu0 0.0
      %496 = vmatprep.subr.mxu0 0.0
      %497 = vmatpush1.msra.mxu0 0.0
      %498 = vmatprep.subr.mxu0 0.0
      %499 = vmatpush1.msra.mxu0 0.0
      %500 = vmatprep.subr.mxu0 0.0
      %501 = vmatpush1.msra.mxu0 0.0
      %502 = vmatprep.subr.mxu0 0.0
      %503 = vmatpush1.msra.mxu0 0.0
      %504 = vmatprep.subr.mxu0 0.0
      %505 = vmatpush1.msra.mxu0 0.0
      %506 = vmatprep.subr.mxu0 0.0
      %507 = vmatpush1.msra.mxu0 0.0
      %508 = vmatprep.mubr.f32.mxu0 0.0
      %509 = vmatmul.mubr.f32.gmra.mrb[0].mxu0 %v349
      %v510 = vpop.f32.mrb[0].mxu0
      %v511 = vadd.f32 %v345, %v510
      %v512 = vpop.f32.mrb[0].mxu0
      %513 = vmatprep.mubr.f32.mxu0 0.0
      %514 = vmatmul.mubr.f32.gmra.mrb[0].mxu0 %v352
      %v515 = vpop.f32.mrb[0].mxu0
      %v516 = vadd.f32 %v345, %v515
      %v517 = vpop.f32.mrb[0].mxu0
      %518 = vmatprep.mubr.f32.mxu0 0.0
      %519 = vmatmul.mubr.f32.gmra.mrb[0].mxu0 %v355
      %v520 = vpop.f32.mrb[0].mxu0
      %v521 = vadd.f32 %v345, %v520
      %v522 = vpop.f32.mrb[0].mxu0
      %523 = vmatprep.mubr.f32.mxu0 0.0
      %524 = vmatmul.mubr.f32.gmra.mrb[0].mxu0 %v358
      %v525 = vpop.f32.mrb[0].mxu0
      %v526 = vadd.f32 %v345, %v525
      %v527 = vpop.f32.mrb[0].mxu0
      %528 = vmatprep.mubr.f32.mxu0 0.0
      %529 = vmatmul.mubr.f32.gmra.mrb[0].mxu0 %v361
      %v530 = vpop.f32.mrb[0].mxu0
      %v531 = vadd.f32 %v345, %v530
      %v532 = vpop.f32.mrb[0].mxu0
      %533 = vmatprep.mubr.f32.mxu0 0.0
      %534 = vmatmul.mubr.f32.gmra.mrb[0].mxu0 %v364
      %v535 = vpop.f32.mrb[0].mxu0
      %v536 = vadd.f32 %v345, %v535
      %v537 = vpop.f32.mrb[0].mxu0
      %538 = vmatprep.mubr.f32.mxu0 0.0
      %539 = vmatmul.mubr.f32.gmra.mrb[0].mxu0 %v367
      %v540 = vpop.f32.mrb[0].mxu0
      %v541 = vadd.f32 %v345, %v540
      %v542 = vpop.f32.mrb[0].mxu0
      %543 = vmatprep.mubr.f32.mxu0 0.0
      %544 = vmatmul.mubr.f32.gmra.mrb[0].mxu0 %v370
      %v545 = vpop.f32.mrb[0].mxu0
      %v546 = vadd.f32 %v345, %v545
      %v547 = vpop.f32.mrb[0].mxu0
      %548 = vmatprep.mubr.f32.mxu0 0.0
      %549 = vmatmul.mubr.f32.gmra.mrb[0].mxu0 %v373
      %v550 = vpop.f32.mrb[0].mxu0
      %v551 = vadd.f32 %v345, %v550
      %v552 = vpop.f32.mrb[0].mxu0
      %553 = vmatprep.mubr.f32.mxu0 0.0
      %554 = vmatmul.mubr.f32.gmra.mrb[0].mxu0 %v376
      %v555 = vpop.f32.mrb[0].mxu0
      %v556 = vadd.f32 %v345, %v555
      %v557 = vpop.f32.mrb[0].mxu0
      %558 = vmatprep.mubr.f32.mxu0 0.0
      %559 = vmatmul.mubr.f32.gmra.mrb[0].mxu0 %v379
      %v560 = vpop.f32.mrb[0].mxu0
      %v561 = vadd.f32 %v345, %v560
      %v562 = vpop.f32.mrb[0].mxu0
      %563 = vmatprep.mubr.f32.mxu0 0.0
      %564 = vmatmul.mubr.f32.gmra.mrb[0].mxu0 %v382
      %v565 = vpop.f32.mrb[0].mxu0
      %v566 = vadd.f32 %v345, %v565
      %v567 = vpop.f32.mrb[0].mxu0
      %568 = vmatprep.mubr.f32.mxu0 0.0
      %569 = vmatmul.mubr.f32.gmra.mrb[0].mxu0 %v385
      %v570 = vpop.f32.mrb[0].mxu0
      %v571 = vadd.f32 %v345, %v570
      %v572 = vpop.f32.mrb[0].mxu0
      %573 = vmatprep.mubr.f32.mxu0 0.0
      %574 = vmatmul.mubr.f32.gmra.mrb[0].mxu0 %v388
      %v575 = vpop.f32.mrb[0].mxu0
      %v576 = vadd.f32 %v345, %v575
      %v577 = vpop.f32.mrb[0].mxu0
      %578 = vmatprep.mubr.f32.mxu0 0.0
      %579 = vmatmul.mubr.f32.gmra.mrb[0].mxu0 %v391
      %v580 = vpop.f32.mrb[0].mxu0
      %v581 = vadd.f32 %v345, %v580
      %v582 = vpop.f32.mrb[0].mxu0
      %583 = vmatprep.mubr.f32.mxu0 0.0
      %584 = vmatmul.mubr.f32.gmra.mrb[0].mxu0 %v394
      %v585 = vpop.f32.mrb[0].mxu0
      %v586 = vadd.f32 %v345, %v585
      %v587 = vpop.f32.mrb[0].mxu0
      %588 = vmatprep.mubr.f32.mxu0 0.0
      %589 = vmatmul.mubr.f32.gmra.mrb[0].mxu0 %v397
      %v590 = vpop.f32.mrb[0].mxu0
      %v591 = vadd.f32 %v345, %v590
      %v592 = vpop.f32.mrb[0].mxu0
      %593 = vmatprep.mubr.f32.mxu0 0.0
      %594 = vmatmul.mubr.f32.gmra.mrb[0].mxu0 %v400
      %v595 = vpop.f32.mrb[0].mxu0
      %v596 = vadd.f32 %v345, %v595
      %v597 = vpop.f32.mrb[0].mxu0
      %598 = vmatprep.mubr.f32.mxu0 0.0
      %599 = vmatmul.mubr.f32.gmra.mrb[0].mxu0 %v403
      %v600 = vpop.f32.mrb[0].mxu0
      %v601 = vadd.f32 %v345, %v600
      %v602 = vpop.f32.mrb[0].mxu0
      %603 = vmatprep.mubr.f32.mxu0 0.0
      %604 = vmatmul.mubr.f32.gmra.mrb[0].mxu0 %v406
      %v605 = vpop.f32.mrb[0].mxu0
      %v606 = vadd.f32 %v345, %v605
      %v607 = vpop.f32.mrb[0].mxu0
      %608 = vmatprep.mubr.f32.mxu0 0.0
      %609 = vmatmul.mubr.f32.gmra.mrb[0].mxu0 %v409
      %v610 = vpop.f32.mrb[0].mxu0
      %v611 = vadd.f32 %v345, %v610
      %v612 = vpop.f32.mrb[0].mxu0
      %613 = vmatprep.mubr.f32.mxu0 0.0
      %614 = vmatmul.mubr.f32.gmra.mrb[0].mxu0 %v412
      %v615 = vpop.f32.mrb[0].mxu0
      %v616 = vadd.f32 %v345, %v615
      %v617 = vpop.f32.mrb[0].mxu0
      %618 = vmatprep.mubr.f32.mxu0 0.0
      %619 = vmatmul.mubr.f32.gmra.mrb[0].mxu0 %v415
      %v620 = vpop.f32.mrb[0].mxu0
      %v621 = vadd.f32 %v345, %v620
      %v622 = vpop.f32.mrb[0].mxu0
      %623 = vmatprep.mubr.f32.mxu0 0.0
      %624 = vmatmul.mubr.f32.gmra.mrb[0].mxu0 %v418
      %v625 = vpop.f32.mrb[0].mxu0
      %v626 = vadd.f32 %v345, %v625
      %v627 = vpop.f32.mrb[0].mxu0
      %628 = vmatprep.mubr.f32.mxu0 0.0
      %629 = vmatmul.mubr.f32.gmra.mrb[0].mxu0 %v421
      %v630 = vpop.f32.mrb[0].mxu0
      %v631 = vadd.f32 %v345, %v630
      %v632 = vpop.f32.mrb[0].mxu0
      %633 = vmatprep.mubr.f32.mxu0 0.0
      %634 = vmatmul.mubr.f32.gmra.mrb[0].mxu0 %v424
      %v635 = vpop.f32.mrb[0].mxu0
      %v636 = vadd.f32 %v345, %v635
      %v637 = vpop.f32.mrb[0].mxu0
      %638 = vmatprep.mubr.f32.mxu0 0.0
      %639 = vmatmul.mubr.f32.gmra.mrb[0].mxu0 %v427
      %v640 = vpop.f32.mrb[0].mxu0
      %v641 = vadd.f32 %v345, %v640
      %v642 = vpop.f32.mrb[0].mxu0
      %643 = vmatprep.mubr.f32.mxu0 0.0
      %644 = vmatmul.mubr.f32.gmra.mrb[0].mxu0 %v430
      %v645 = vpop.f32.mrb[0].mxu0
      %v646 = vadd.f32 %v345, %v645
      %v647 = vpop.f32.mrb[0].mxu0
      %648 = vmatprep.mubr.f32.mxu0 0.0
      %649 = vmatmul.mubr.f32.gmra.mrb[0].mxu0 %v433
      %v650 = vpop.f32.mrb[0].mxu0
      %v651 = vadd.f32 %v345, %v650
      %v652 = vpop.f32.mrb[0].mxu0
      %653 = vmatprep.mubr.f32.mxu0 0.0
      %654 = vmatmul.mubr.f32.gmra.mrb[0].mxu0 %v436
      %v655 = vpop.f32.mrb[0].mxu0
      %v656 = vadd.f32 %v345, %v655
      %v657 = vpop.f32.mrb[0].mxu0
      %658 = vmatprep.mubr.f32.mxu0 0.0
      %659 = vmatmul.mubr.f32.gmra.mrb[0].mxu0 %v439
      %v660 = vpop.f32.mrb[0].mxu0
      %v661 = vadd.f32 %v345, %v660
      %v662 = vpop.f32.mrb[0].mxu0
      %663 = vmatprep.mubr.f32.mxu0 0.0
      %664 = vmatmul.mubr.f32.gmra.mrb[0].mxu0 %v442
      %v665 = vpop.f32.mrb[0].mxu0
      %v666 = vadd.f32 %v345, %v665
      %v667 = vpop.f32.mrb[0].mxu0
      %668 = vdwg.mxu0
      %v669 = vld [vmem:[%s296] sm:$0xff]
      %v670 = vld [vmem:[%s296 + $0x8] sm:$0xff]
      %v671 = vld [vmem:[%s296 + $0x10] sm:$0xff]
      %v672 = vld [vmem:[%s296 + $0x18] sm:$0xff]
      %v673 = vld [vmem:[%s296 + $0x20] sm:$0xff]
      %v674 = vld [vmem:[%s296 + $0x28] sm:$0xff]
      %v675 = vld [vmem:[%s296 + $0x30] sm:$0xff]
      %v676 = vld [vmem:[%s296 + $0x38] sm:$0xff]
      %v677 = vld [vmem:[%s296 + $0x40] sm:$0xff]
      %v678 = vld [vmem:[%s296 + $0x48] sm:$0xff]
      %v679 = vld [vmem:[%s296 + $0x50] sm:$0xff]
      %v680 = vld [vmem:[%s296 + $0x58] sm:$0xff]
      %v681 = vld [vmem:[%s296 + $0x60] sm:$0xff]
      %v682 = vld [vmem:[%s296 + $0x68] sm:$0xff]
      %v683 = vld [vmem:[%s296 + $0x70] sm:$0xff]
      %v684 = vld [vmem:[%s296 + $0x78] sm:$0xff]
      %v685 = vld [vmem:[%s296 + $0x80] sm:$0xff]
      %v686 = vld [vmem:[%s296 + $0x88] sm:$0xff]
      %v687 = vld [vmem:[%s296 + $0x90] sm:$0xff]
      %v688 = vld [vmem:[%s296 + $0x98] sm:$0xff]
      %v689 = vld [vmem:[%s296 + $0xa0] sm:$0xff]
      %v690 = vld [vmem:[%s296 + $0xa8] sm:$0xff]
      %v691 = vld [vmem:[%s296 + $0xb0] sm:$0xff]
      %v692 = vld [vmem:[%s296 + $0xb8] sm:$0xff]
      %v693 = vld [vmem:[%s296 + $0xc0] sm:$0xff]
      %v694 = vld [vmem:[%s296 + $0xc8] sm:$0xff]
      %v695 = vld [vmem:[%s296 + $0xd0] sm:$0xff]
      %v696 = vld [vmem:[%s296 + $0xd8] sm:$0xff]
      %v697 = vld [vmem:[%s296 + $0xe0] sm:$0xff]
      %v698 = vld [vmem:[%s296 + $0xe8] sm:$0xff]
      %v699 = vld [vmem:[%s296 + $0xf0] sm:$0xff]
      %v700 = vld [vmem:[%s296 + $0xf8] sm:$0xff]
      %v701 = vld [vmem:[%s4] sm:$0xff]
      %v702 = vld [vmem:[%s4 + $0x8] sm:$0xff]
      %v703 = vld [vmem:[%s4 + $0x10] sm:$0xff]
      %v704 = vld [vmem:[%s4 + $0x18] sm:$0xff]
      %v705 = vld [vmem:[%s4 + $0x20] sm:$0xff]
      %v706 = vld [vmem:[%s4 + $0x28] sm:$0xff]
      %v707 = vld [vmem:[%s4 + $0x30] sm:$0xff]
      %v708 = vld [vmem:[%s4 + $0x38] sm:$0xff]
      %v709 = vld [vmem:[%s4 + $0x40] sm:$0xff]
      %v710 = vld [vmem:[%s4 + $0x48] sm:$0xff]
      %v711 = vld [vmem:[%s4 + $0x50] sm:$0xff]
      %v712 = vld [vmem:[%s4 + $0x58] sm:$0xff]
      %v713 = vld [vmem:[%s5] sm:$0x1]
      %v715 = vlaneseq
      %v716 = vshrl.u32 %v715, 7
      %v717 = vsub.s32 0, %v716
      %v718 = vrot.slane %v713, %v717
      %vm720 = vcmask 785408
      %v722 = vsel %vm720, %v669, 0
      %v725 = vsel %vm720, %v670, 0
      %v728 = vsel %vm720, %v671, 0
      %v731 = vsel %vm720, %v672, 0
      %v734 = vsel %vm720, %v673, 0
      %v737 = vsel %vm720, %v674, 0
      %v740 = vsel %vm720, %v675, 0
      %v743 = vsel %vm720, %v676, 0
      %v746 = vsel %vm720, %v677, 0
      %v749 = vsel %vm720, %v678, 0
      %v752 = vsel %vm720, %v679, 0
      %v755 = vsel %vm720, %v680, 0
      %v758 = vsel %vm720, %v681, 0
      %v761 = vsel %vm720, %v682, 0
      %v764 = vsel %vm720, %v683, 0
      %v767 = vsel %vm720, %v684, 0
      %v770 = vsel %vm720, %v685, 0
      %v773 = vsel %vm720, %v686, 0
      %v776 = vsel %vm720, %v687, 0
      %v779 = vsel %vm720, %v688, 0
      %v782 = vsel %vm720, %v689, 0
      %v785 = vsel %vm720, %v690, 0
      %v788 = vsel %vm720, %v691, 0
      %v791 = vsel %vm720, %v692, 0
      %v794 = vsel %vm720, %v693, 0
      %v797 = vsel %vm720, %v694, 0
      %v800 = vsel %vm720, %v695, 0
      %v803 = vsel %vm720, %v696, 0
      %v806 = vsel %vm720, %v697, 0
      %v809 = vsel %vm720, %v698, 0
      %v812 = vsel %vm720, %v699, 0
      %v815 = vsel %vm720, %v700, 0
      %817 = vmatprep.subr.mxu0 0.0
      %818 = vmatpush1.msra.mxu0 %v701
      %819 = vmatprep.subr.mxu0 0.0
      %820 = vmatpush1.msra.mxu0 %v702
      %821 = vmatprep.subr.mxu0 0.0
      %822 = vmatpush1.msra.mxu0 %v703
      %823 = vmatprep.subr.mxu0 0.0
      %824 = vmatpush1.msra.mxu0 %v704
      %825 = vmatprep.subr.mxu0 0.0
      %826 = vmatpush1.msra.mxu0 %v705
      %827 = vmatprep.subr.mxu0 0.0
      %828 = vmatpush1.msra.mxu0 %v706
      %829 = vmatprep.subr.mxu0 0.0
      %830 = vmatpush1.msra.mxu0 %v707
      %831 = vmatprep.subr.mxu0 0.0
      %832 = vmatpush1.msra.mxu0 %v708
      %833 = vmatprep.subr.mxu0 0.0
      %834 = vmatpush1.msra.mxu0 %v709
      %835 = vmatprep.subr.mxu0 0.0
      %836 = vmatpush1.msra.mxu0 %v710
      %837 = vmatprep.subr.mxu0 0.0
      %838 = vmatpush1.msra.mxu0 %v711
      %839 = vmatprep.subr.mxu0 0.0
      %840 = vmatpush1.msra.mxu0 %v712
      %841 = vmatprep.subr.mxu0 0.0
      %842 = vmatpush1.msra.mxu0 0.0
      %843 = vmatprep.subr.mxu0 0.0
      %844 = vmatpush1.msra.mxu0 0.0
      %845 = vmatprep.subr.mxu0 0.0
      %846 = vmatpush1.msra.mxu0 0.0
      %847 = vmatprep.subr.mxu0 0.0
      %848 = vmatpush1.msra.mxu0 0.0
      %849 = vmatprep.subr.mxu0 0.0
      %850 = vmatpush1.msra.mxu0 0.0
      %851 = vmatprep.subr.mxu0 0.0
      %852 = vmatpush1.msra.mxu0 0.0
      %853 = vmatprep.subr.mxu0 0.0
      %854 = vmatpush1.msra.mxu0 0.0
      %855 = vmatprep.subr.mxu0 0.0
      %856 = vmatpush1.msra.mxu0 0.0
      %857 = vmatprep.subr.mxu0 0.0
      %858 = vmatpush1.msra.mxu0 0.0
      %859 = vmatprep.subr.mxu0 0.0
      %860 = vmatpush1.msra.mxu0 0.0
      %861 = vmatprep.subr.mxu0 0.0
      %862 = vmatpush1.msra.mxu0 0.0
      %863 = vmatprep.subr.mxu0 0.0
      %864 = vmatpush1.msra.mxu0 0.0
      %865 = vmatprep.subr.mxu0 0.0
      %866 = vmatpush1.msra.mxu0 0.0
      %867 = vmatprep.subr.mxu0 0.0
      %868 = vmatpush1.msra.mxu0 0.0
      %869 = vmatprep.subr.mxu0 0.0
      %870 = vmatpush1.msra.mxu0 0.0
      %871 = vmatprep.subr.mxu0 0.0
      %872 = vmatpush1.msra.mxu0 0.0
      %873 = vmatprep.subr.mxu0 0.0
      %874 = vmatpush1.msra.mxu0 0.0
      %875 = vmatprep.subr.mxu0 0.0
      %876 = vmatpush1.msra.mxu0 0.0
      %877 = vmatprep.subr.mxu0 0.0
      %878 = vmatpush1.msra.mxu0 0.0
      %879 = vmatprep.subr.mxu0 0.0
      %880 = vmatpush1.msra.mxu0 0.0
      %881 = vmatprep.mubr.f32.mxu0 0.0
      %882 = vmatmul.mubr.f32.gmra.mrb[0].mxu0 %v722
      %v883 = vpop.f32.mrb[0].mxu0
      %v884 = vadd.f32 %v718, %v883
      %v885 = vpop.f32.mrb[0].mxu0
      %886 = vmatprep.mubr.f32.mxu0 0.0
      %887 = vmatmul.mubr.f32.gmra.mrb[0].mxu0 %v725
      %v888 = vpop.f32.mrb[0].mxu0
      %v889 = vadd.f32 %v718, %v888
      %v890 = vpop.f32.mrb[0].mxu0
      %891 = vmatprep.mubr.f32.mxu0 0.0
      %892 = vmatmul.mubr.f32.gmra.mrb[0].mxu0 %v728
      %v893 = vpop.f32.mrb[0].mxu0
      %v894 = vadd.f32 %v718, %v893
      %v895 = vpop.f32.mrb[0].mxu0
      %896 = vmatprep.mubr.f32.mxu0 0.0
      %897 = vmatmul.mubr.f32.gmra.mrb[0].mxu0 %v731
      %v898 = vpop.f32.mrb[0].mxu0
      %v899 = vadd.f32 %v718, %v898
      %v900 = vpop.f32.mrb[0].mxu0
      %901 = vmatprep.mubr.f32.mxu0 0.0
      %902 = vmatmul.mubr.f32.gmra.mrb[0].mxu0 %v734
      %v903 = vpop.f32.mrb[0].mxu0
      %v904 = vadd.f32 %v718, %v903
      %v905 = vpop.f32.mrb[0].mxu0
      %906 = vmatprep.mubr.f32.mxu0 0.0
      %907 = vmatmul.mubr.f32.gmra.mrb[0].mxu0 %v737
      %v908 = vpop.f32.mrb[0].mxu0
      %v909 = vadd.f32 %v718, %v908
      %v910 = vpop.f32.mrb[0].mxu0
      %911 = vmatprep.mubr.f32.mxu0 0.0
      %912 = vmatmul.mubr.f32.gmra.mrb[0].mxu0 %v740
      %v913 = vpop.f32.mrb[0].mxu0
      %v914 = vadd.f32 %v718, %v913
      %v915 = vpop.f32.mrb[0].mxu0
      %916 = vmatprep.mubr.f32.mxu0 0.0
      %917 = vmatmul.mubr.f32.gmra.mrb[0].mxu0 %v743
      %v918 = vpop.f32.mrb[0].mxu0
      %v919 = vadd.f32 %v718, %v918
      %v920 = vpop.f32.mrb[0].mxu0
      %921 = vmatprep.mubr.f32.mxu0 0.0
      %922 = vmatmul.mubr.f32.gmra.mrb[0].mxu0 %v746
      %v923 = vpop.f32.mrb[0].mxu0
      %v924 = vadd.f32 %v718, %v923
      %v925 = vpop.f32.mrb[0].mxu0
      %926 = vmatprep.mubr.f32.mxu0 0.0
      %927 = vmatmul.mubr.f32.gmra.mrb[0].mxu0 %v749
      %v928 = vpop.f32.mrb[0].mxu0
      %v929 = vadd.f32 %v718, %v928
      %v930 = vpop.f32.mrb[0].mxu0
      %931 = vmatprep.mubr.f32.mxu0 0.0
      %932 = vmatmul.mubr.f32.gmra.mrb[0].mxu0 %v752
      %v933 = vpop.f32.mrb[0].mxu0
      %v934 = vadd.f32 %v718, %v933
      %v935 = vpop.f32.mrb[0].mxu0
      %936 = vmatprep.mubr.f32.mxu0 0.0
      %937 = vmatmul.mubr.f32.gmra.mrb[0].mxu0 %v755
      %v938 = vpop.f32.mrb[0].mxu0
      %v939 = vadd.f32 %v718, %v938
      %v940 = vpop.f32.mrb[0].mxu0
      %941 = vmatprep.mubr.f32.mxu0 0.0
      %942 = vmatmul.mubr.f32.gmra.mrb[0].mxu0 %v758
      %v943 = vpop.f32.mrb[0].mxu0
      %v944 = vadd.f32 %v718, %v943
      %v945 = vpop.f32.mrb[0].mxu0
      %946 = vmatprep.mubr.f32.mxu0 0.0
      %947 = vmatmul.mubr.f32.gmra.mrb[0].mxu0 %v761
      %v948 = vpop.f32.mrb[0].mxu0
      %v949 = vadd.f32 %v718, %v948
      %v950 = vpop.f32.mrb[0].mxu0
      %951 = vmatprep.mubr.f32.mxu0 0.0
      %952 = vmatmul.mubr.f32.gmra.mrb[0].mxu0 %v764
      %v953 = vpop.f32.mrb[0].mxu0
      %v954 = vadd.f32 %v718, %v953
      %v955 = vpop.f32.mrb[0].mxu0
      %956 = vmatprep.mubr.f32.mxu0 0.0
      %957 = vmatmul.mubr.f32.gmra.mrb[0].mxu0 %v767
      %v958 = vpop.f32.mrb[0].mxu0
      %v959 = vadd.f32 %v718, %v958
      %v960 = vpop.f32.mrb[0].mxu0
      %961 = vmatprep.mubr.f32.mxu0 0.0
      %962 = vmatmul.mubr.f32.gmra.mrb[0].mxu0 %v770
      %v963 = vpop.f32.mrb[0].mxu0
      %v964 = vadd.f32 %v718, %v963
      %v965 = vpop.f32.mrb[0].mxu0
      %966 = vmatprep.mubr.f32.mxu0 0.0
      %967 = vmatmul.mubr.f32.gmra.mrb[0].mxu0 %v773
      %v968 = vpop.f32.mrb[0].mxu0
      %v969 = vadd.f32 %v718, %v968
      %v970 = vpop.f32.mrb[0].mxu0
      %971 = vmatprep.mubr.f32.mxu0 0.0
      %972 = vmatmul.mubr.f32.gmra.mrb[0].mxu0 %v776
      %v973 = vpop.f32.mrb[0].mxu0
      %v974 = vadd.f32 %v718, %v973
      %v975 = vpop.f32.mrb[0].mxu0
      %976 = vmatprep.mubr.f32.mxu0 0.0
      %977 = vmatmul.mubr.f32.gmra.mrb[0].mxu0 %v779
      %v978 = vpop.f32.mrb[0].mxu0
      %v979 = vadd.f32 %v718, %v978
      %v980 = vpop.f32.mrb[0].mxu0
      %981 = vmatprep.mubr.f32.mxu0 0.0
      %982 = vmatmul.mubr.f32.gmra.mrb[0].mxu0 %v782
      %v983 = vpop.f32.mrb[0].mxu0
      %v984 = vadd.f32 %v718, %v983
      %v985 = vpop.f32.mrb[0].mxu0
      %986 = vmatprep.mubr.f32.mxu0 0.0
      %987 = vmatmul.mubr.f32.gmra.mrb[0].mxu0 %v785
      %v988 = vpop.f32.mrb[0].mxu0
      %v989 = vadd.f32 %v718, %v988
      %v990 = vpop.f32.mrb[0].mxu0
      %991 = vmatprep.mubr.f32.mxu0 0.0
      %992 = vmatmul.mubr.f32.gmra.mrb[0].mxu0 %v788
      %v993 = vpop.f32.mrb[0].mxu0
      %v994 = vadd.f32 %v718, %v993
      %v995 = vpop.f32.mrb[0].mxu0
      %996 = vmatprep.mubr.f32.mxu0 0.0
      %997 = vmatmul.mubr.f32.gmra.mrb[0].mxu0 %v791
      %v998 = vpop.f32.mrb[0].mxu0
      %v999 = vadd.f32 %v718, %v998
      %v1000 = vpop.f32.mrb[0].mxu0
      %1001 = vmatprep.mubr.f32.mxu0 0.0
      %1002 = vmatmul.mubr.f32.gmra.mrb[0].mxu0 %v794
      %v1003 = vpop.f32.mrb[0].mxu0
      %v1004 = vadd.f32 %v718, %v1003
      %v1005 = vpop.f32.mrb[0].mxu0
      %1006 = vmatprep.mubr.f32.mxu0 0.0
      %1007 = vmatmul.mubr.f32.gmra.mrb[0].mxu0 %v797
      %v1008 = vpop.f32.mrb[0].mxu0
      %v1009 = vadd.f32 %v718, %v1008
      %v1010 = vpop.f32.mrb[0].mxu0
      %1011 = vmatprep.mubr.f32.mxu0 0.0
      %1012 = vmatmul.mubr.f32.gmra.mrb[0].mxu0 %v800
      %v1013 = vpop.f32.mrb[0].mxu0
      %v1014 = vadd.f32 %v718, %v1013
      %v1015 = vpop.f32.mrb[0].mxu0
      %1016 = vmatprep.mubr.f32.mxu0 0.0
      %1017 = vmatmul.mubr.f32.gmra.mrb[0].mxu0 %v803
      %v1018 = vpop.f32.mrb[0].mxu0
      %v1019 = vadd.f32 %v718, %v1018
      %v1020 = vpop.f32.mrb[0].mxu0
      %1021 = vmatprep.mubr.f32.mxu0 0.0
      %1022 = vmatmul.mubr.f32.gmra.mrb[0].mxu0 %v806
      %v1023 = vpop.f32.mrb[0].mxu0
      %v1024 = vadd.f32 %v718, %v1023
      %v1025 = vpop.f32.mrb[0].mxu0
      %1026 = vmatprep.mubr.f32.mxu0 0.0
      %1027 = vmatmul.mubr.f32.gmra.mrb[0].mxu0 %v809
      %v1028 = vpop.f32.mrb[0].mxu0
      %v1029 = vadd.f32 %v718, %v1028
      %v1030 = vpop.f32.mrb[0].mxu0
      %1031 = vmatprep.mubr.f32.mxu0 0.0
      %1032 = vmatmul.mubr.f32.gmra.mrb[0].mxu0 %v812
      %v1033 = vpop.f32.mrb[0].mxu0
      %v1034 = vadd.f32 %v718, %v1033
      %v1035 = vpop.f32.mrb[0].mxu0
      %1036 = vmatprep.mubr.f32.mxu0 0.0
      %1037 = vmatmul.mubr.f32.gmra.mrb[0].mxu0 %v815
      %v1038 = vpop.f32.mrb[0].mxu0
      %v1039 = vadd.f32 %v718, %v1038
      %v1040 = vpop.f32.mrb[0].mxu0
      %1041 = vdwg.mxu0
      %v1042 = vmul.f32 %v511, %v884
      %v1043 = vmul.f32 %v516, %v889
      %v1044 = vmul.f32 %v521, %v894
      %v1045 = vmul.f32 %v526, %v899
      %v1046 = vmul.f32 %v531, %v904
      %v1047 = vmul.f32 %v536, %v909
      %v1048 = vmul.f32 %v541, %v914
      %v1049 = vmul.f32 %v546, %v919
      %v1050 = vmul.f32 %v551, %v924
      %v1051 = vmul.f32 %v556, %v929
      %v1052 = vmul.f32 %v561, %v934
      %v1053 = vmul.f32 %v566, %v939
      %v1054 = vmul.f32 %v571, %v944
      %v1055 = vmul.f32 %v576, %v949
      %v1056 = vmul.f32 %v581, %v954
      %v1057 = vmul.f32 %v586, %v959
      %v1058 = vmul.f32 %v591, %v964
      %v1059 = vmul.f32 %v596, %v969
      %v1060 = vmul.f32 %v601, %v974
      %v1061 = vmul.f32 %v606, %v979
      %v1062 = vmul.f32 %v611, %v984
      %v1063 = vmul.f32 %v616, %v989
      %v1064 = vmul.f32 %v621, %v994
      %v1065 = vmul.f32 %v626, %v999
      %v1066 = vmul.f32 %v631, %v1004
      %v1067 = vmul.f32 %v636, %v1009
      %v1068 = vmul.f32 %v641, %v1014
      %v1069 = vmul.f32 %v646, %v1019
      %v1070 = vmul.f32 %v651, %v1024
      %v1071 = vmul.f32 %v656, %v1029
      %v1072 = vmul.f32 %v661, %v1034
      %v1073 = vmul.f32 %v666, %v1039
      %v1074 = vld [vmem:[%s6] sm:$0xff]
      %v1075 = vld [vmem:[%s6 + $0x8] sm:$0xff]
      %v1076 = vld [vmem:[%s6 + $0x10] sm:$0xff]
      %v1077 = vld [vmem:[%s6 + $0x18] sm:$0xff]
      %v1079 = vsel %vm347, %v1042, 0
      %v1082 = vsel %vm347, %v1043, 0
      %v1085 = vsel %vm347, %v1044, 0
      %v1088 = vsel %vm347, %v1045, 0
      %v1091 = vsel %vm347, %v1046, 0
      %v1094 = vsel %vm347, %v1047, 0
      %v1097 = vsel %vm347, %v1048, 0
      %v1100 = vsel %vm347, %v1049, 0
      %v1103 = vsel %vm347, %v1050, 0
      %v1106 = vsel %vm347, %v1051, 0
      %v1109 = vsel %vm347, %v1052, 0
      %v1112 = vsel %vm347, %v1053, 0
      %v1115 = vsel %vm347, %v1054, 0
      %v1118 = vsel %vm347, %v1055, 0
      %v1121 = vsel %vm347, %v1056, 0
      %v1124 = vsel %vm347, %v1057, 0
      %v1127 = vsel %vm347, %v1058, 0
      %v1130 = vsel %vm347, %v1059, 0
      %v1133 = vsel %vm347, %v1060, 0
      %v1136 = vsel %vm347, %v1061, 0
      %v1139 = vsel %vm347, %v1062, 0
      %v1142 = vsel %vm347, %v1063, 0
      %v1145 = vsel %vm347, %v1064, 0
      %v1148 = vsel %vm347, %v1065, 0
      %v1151 = vsel %vm347, %v1066, 0
      %v1154 = vsel %vm347, %v1067, 0
      %v1157 = vsel %vm347, %v1068, 0
      %v1160 = vsel %vm347, %v1069, 0
      %v1163 = vsel %vm347, %v1070, 0
      %v1166 = vsel %vm347, %v1071, 0
      %v1169 = vsel %vm347, %v1072, 0
      %v1172 = vsel %vm347, %v1073, 0
      %1174 = vmatprep.subr.mxu0 0.0
      %1175 = vmatpush1.msra.mxu0 %v1074
      %1176 = vmatprep.subr.mxu0 0.0
      %1177 = vmatpush1.msra.mxu0 %v1075
      %1178 = vmatprep.subr.mxu0 0.0
      %1179 = vmatpush1.msra.mxu0 %v1076
      %1180 = vmatprep.subr.mxu0 0.0
      %1181 = vmatpush1.msra.mxu0 %v1077
      %1182 = vmatprep.subr.mxu0 0.0
      %1183 = vmatpush1.msra.mxu0 0.0
      %1184 = vmatprep.subr.mxu0 0.0
      %1185 = vmatpush1.msra.mxu0 0.0
      %1186 = vmatprep.subr.mxu0 0.0
      %1187 = vmatpush1.msra.mxu0 0.0
      %1188 = vmatprep.subr.mxu0 0.0
      %1189 = vmatpush1.msra.mxu0 0.0
      %1190 = vmatprep.subr.mxu0 0.0
      %1191 = vmatpush1.msra.mxu0 0.0
      %1192 = vmatprep.subr.mxu0 0.0
      %1193 = vmatpush1.msra.mxu0 0.0
      %1194 = vmatprep.subr.mxu0 0.0
      %1195 = vmatpush1.msra.mxu0 0.0
      %1196 = vmatprep.subr.mxu0 0.0
      %1197 = vmatpush1.msra.mxu0 0.0
      %1198 = vmatprep.subr.mxu0 0.0
      %1199 = vmatpush1.msra.mxu0 0.0
      %1200 = vmatprep.subr.mxu0 0.0
      %1201 = vmatpush1.msra.mxu0 0.0
      %1202 = vmatprep.subr.mxu0 0.0
      %1203 = vmatpush1.msra.mxu0 0.0
      %1204 = vmatprep.subr.mxu0 0.0
      %1205 = vmatpush1.msra.mxu0 0.0
      %1206 = vmatprep.subr.mxu0 0.0
      %1207 = vmatpush1.msra.mxu0 0.0
      %1208 = vmatprep.subr.mxu0 0.0
      %1209 = vmatpush1.msra.mxu0 0.0
      %1210 = vmatprep.subr.mxu0 0.0
      %1211 = vmatpush1.msra.mxu0 0.0
      %1212 = vmatprep.subr.mxu0 0.0
      %1213 = vmatpush1.msra.mxu0 0.0
      %1214 = vmatprep.subr.mxu0 0.0
      %1215 = vmatpush1.msra.mxu0 0.0
      %1216 = vmatprep.subr.mxu0 0.0
      %1217 = vmatpush1.msra.mxu0 0.0
      %1218 = vmatprep.subr.mxu0 0.0
      %1219 = vmatpush1.msra.mxu0 0.0
      %1220 = vmatprep.subr.mxu0 0.0
      %1221 = vmatpush1.msra.mxu0 0.0
      %1222 = vmatprep.subr.mxu0 0.0
      %1223 = vmatpush1.msra.mxu0 0.0
      %1224 = vmatprep.subr.mxu0 0.0
      %1225 = vmatpush1.msra.mxu0 0.0
      %1226 = vmatprep.subr.mxu0 0.0
      %1227 = vmatpush1.msra.mxu0 0.0
      %1228 = vmatprep.subr.mxu0 0.0
      %1229 = vmatpush1.msra.mxu0 0.0
      %1230 = vmatprep.subr.mxu0 0.0
      %1231 = vmatpush1.msra.mxu0 0.0
      %1232 = vmatprep.subr.mxu0 0.0
      %1233 = vmatpush1.msra.mxu0 0.0
      %1234 = vmatprep.subr.mxu0 0.0
      %1235 = vmatpush1.msra.mxu0 0.0
      %1236 = vmatprep.subr.mxu0 0.0
      %1237 = vmatpush1.msra.mxu0 0.0
      %1238 = vmatprep.mubr.f32.mxu0 0.0
      %1239 = vmatmul.mubr.f32.gmra.mrb[0].mxu0 %v1079
      %v1240 = vpop.f32.mrb[0].mxu0
      %v1241 = vadd.f32 0.0, %v1240
      %v1242 = vpop.f32.mrb[0].mxu0
      %1243 = vmatprep.mubr.f32.mxu0 0.0
      %1244 = vmatmul.mubr.f32.gmra.mrb[0].mxu0 %v1082
      %v1245 = vpop.f32.mrb[0].mxu0
      %v1246 = vadd.f32 0.0, %v1245
      %v1247 = vpop.f32.mrb[0].mxu0
      %1248 = vmatprep.mubr.f32.mxu0 0.0
      %1249 = vmatmul.mubr.f32.gmra.mrb[0].mxu0 %v1085
      %v1250 = vpop.f32.mrb[0].mxu0
      %v1251 = vadd.f32 0.0, %v1250
      %v1252 = vpop.f32.mrb[0].mxu0
      %1253 = vmatprep.mubr.f32.mxu0 0.0
      %1254 = vmatmul.mubr.f32.gmra.mrb[0].mxu0 %v1088
      %v1255 = vpop.f32.mrb[0].mxu0
      %v1256 = vadd.f32 0.0, %v1255
      %v1257 = vpop.f32.mrb[0].mxu0
      %1258 = vmatprep.mubr.f32.mxu0 0.0
      %1259 = vmatmul.mubr.f32.gmra.mrb[0].mxu0 %v1091
      %v1260 = vpop.f32.mrb[0].mxu0
      %v1261 = vadd.f32 0.0, %v1260
      %v1262 = vpop.f32.mrb[0].mxu0
      %1263 = vmatprep.mubr.f32.mxu0 0.0
      %1264 = vmatmul.mubr.f32.gmra.mrb[0].mxu0 %v1094
      %v1265 = vpop.f32.mrb[0].mxu0
      %v1266 = vadd.f32 0.0, %v1265
      %v1267 = vpop.f32.mrb[0].mxu0
      %1268 = vmatprep.mubr.f32.mxu0 0.0
      %1269 = vmatmul.mubr.f32.gmra.mrb[0].mxu0 %v1097
      %v1270 = vpop.f32.mrb[0].mxu0
      %v1271 = vadd.f32 0.0, %v1270
      %v1272 = vpop.f32.mrb[0].mxu0
      %1273 = vmatprep.mubr.f32.mxu0 0.0
      %1274 = vmatmul.mubr.f32.gmra.mrb[0].mxu0 %v1100
      %v1275 = vpop.f32.mrb[0].mxu0
      %v1276 = vadd.f32 0.0, %v1275
      %v1277 = vpop.f32.mrb[0].mxu0
      %1278 = vmatprep.mubr.f32.mxu0 0.0
      %1279 = vmatmul.mubr.f32.gmra.mrb[0].mxu0 %v1103
      %v1280 = vpop.f32.mrb[0].mxu0
      %v1281 = vadd.f32 0.0, %v1280
      %v1282 = vpop.f32.mrb[0].mxu0
      %1283 = vmatprep.mubr.f32.mxu0 0.0
      %1284 = vmatmul.mubr.f32.gmra.mrb[0].mxu0 %v1106
      %v1285 = vpop.f32.mrb[0].mxu0
      %v1286 = vadd.f32 0.0, %v1285
      %v1287 = vpop.f32.mrb[0].mxu0
      %1288 = vmatprep.mubr.f32.mxu0 0.0
      %1289 = vmatmul.mubr.f32.gmra.mrb[0].mxu0 %v1109
      %v1290 = vpop.f32.mrb[0].mxu0
      %v1291 = vadd.f32 0.0, %v1290
      %v1292 = vpop.f32.mrb[0].mxu0
      %1293 = vmatprep.mubr.f32.mxu0 0.0
      %1294 = vmatmul.mubr.f32.gmra.mrb[0].mxu0 %v1112
      %v1295 = vpop.f32.mrb[0].mxu0
      %v1296 = vadd.f32 0.0, %v1295
      %v1297 = vpop.f32.mrb[0].mxu0
      %1298 = vmatprep.mubr.f32.mxu0 0.0
      %1299 = vmatmul.mubr.f32.gmra.mrb[0].mxu0 %v1115
      %v1300 = vpop.f32.mrb[0].mxu0
      %v1301 = vadd.f32 0.0, %v1300
      %v1302 = vpop.f32.mrb[0].mxu0
      %1303 = vmatprep.mubr.f32.mxu0 0.0
      %1304 = vmatmul.mubr.f32.gmra.mrb[0].mxu0 %v1118
      %v1305 = vpop.f32.mrb[0].mxu0
      %v1306 = vadd.f32 0.0, %v1305
      %v1307 = vpop.f32.mrb[0].mxu0
      %1308 = vmatprep.mubr.f32.mxu0 0.0
      %1309 = vmatmul.mubr.f32.gmra.mrb[0].mxu0 %v1121
      %v1310 = vpop.f32.mrb[0].mxu0
      %v1311 = vadd.f32 0.0, %v1310
      %v1312 = vpop.f32.mrb[0].mxu0
      %1313 = vmatprep.mubr.f32.mxu0 0.0
      %1314 = vmatmul.mubr.f32.gmra.mrb[0].mxu0 %v1124
      %v1315 = vpop.f32.mrb[0].mxu0
      %v1316 = vadd.f32 0.0, %v1315
      %v1317 = vpop.f32.mrb[0].mxu0
      %1318 = vmatprep.mubr.f32.mxu0 0.0
      %1319 = vmatmul.mubr.f32.gmra.mrb[0].mxu0 %v1127
      %v1320 = vpop.f32.mrb[0].mxu0
      %v1321 = vadd.f32 0.0, %v1320
      %v1322 = vpop.f32.mrb[0].mxu0
      %1323 = vmatprep.mubr.f32.mxu0 0.0
      %1324 = vmatmul.mubr.f32.gmra.mrb[0].mxu0 %v1130
      %v1325 = vpop.f32.mrb[0].mxu0
      %v1326 = vadd.f32 0.0, %v1325
      %v1327 = vpop.f32.mrb[0].mxu0
      %1328 = vmatprep.mubr.f32.mxu0 0.0
      %1329 = vmatmul.mubr.f32.gmra.mrb[0].mxu0 %v1133
      %v1330 = vpop.f32.mrb[0].mxu0
      %v1331 = vadd.f32 0.0, %v1330
      %v1332 = vpop.f32.mrb[0].mxu0
      %1333 = vmatprep.mubr.f32.mxu0 0.0
      %1334 = vmatmul.mubr.f32.gmra.mrb[0].mxu0 %v1136
      %v1335 = vpop.f32.mrb[0].mxu0
      %v1336 = vadd.f32 0.0, %v1335
      %v1337 = vpop.f32.mrb[0].mxu0
      %1338 = vmatprep.mubr.f32.mxu0 0.0
      %1339 = vmatmul.mubr.f32.gmra.mrb[0].mxu0 %v1139
      %v1340 = vpop.f32.mrb[0].mxu0
      %v1341 = vadd.f32 0.0, %v1340
      %v1342 = vpop.f32.mrb[0].mxu0
      %1343 = vmatprep.mubr.f32.mxu0 0.0
      %1344 = vmatmul.mubr.f32.gmra.mrb[0].mxu0 %v1142
      %v1345 = vpop.f32.mrb[0].mxu0
      %v1346 = vadd.f32 0.0, %v1345
      %v1347 = vpop.f32.mrb[0].mxu0
      %1348 = vmatprep.mubr.f32.mxu0 0.0
      %1349 = vmatmul.mubr.f32.gmra.mrb[0].mxu0 %v1145
      %v1350 = vpop.f32.mrb[0].mxu0
      %v1351 = vadd.f32 0.0, %v1350
      %v1352 = vpop.f32.mrb[0].mxu0
      %1353 = vmatprep.mubr.f32.mxu0 0.0
      %1354 = vmatmul.mubr.f32.gmra.mrb[0].mxu0 %v1148
      %v1355 = vpop.f32.mrb[0].mxu0
      %v1356 = vadd.f32 0.0, %v1355
      %v1357 = vpop.f32.mrb[0].mxu0
      %1358 = vmatprep.mubr.f32.mxu0 0.0
      %1359 = vmatmul.mubr.f32.gmra.mrb[0].mxu0 %v1151
      %v1360 = vpop.f32.mrb[0].mxu0
      %v1361 = vadd.f32 0.0, %v1360
      %v1362 = vpop.f32.mrb[0].mxu0
      %1363 = vmatprep.mubr.f32.mxu0 0.0
      %1364 = vmatmul.mubr.f32.gmra.mrb[0].mxu0 %v1154
      %v1365 = vpop.f32.mrb[0].mxu0
      %v1366 = vadd.f32 0.0, %v1365
      %v1367 = vpop.f32.mrb[0].mxu0
      %1368 = vmatprep.mubr.f32.mxu0 0.0
      %1369 = vmatmul.mubr.f32.gmra.mrb[0].mxu0 %v1157
      %v1370 = vpop.f32.mrb[0].mxu0
      %v1371 = vadd.f32 0.0, %v1370
      %v1372 = vpop.f32.mrb[0].mxu0
      %1373 = vmatprep.mubr.f32.mxu0 0.0
      %1374 = vmatmul.mubr.f32.gmra.mrb[0].mxu0 %v1160
      %v1375 = vpop.f32.mrb[0].mxu0
      %v1376 = vadd.f32 0.0, %v1375
      %v1377 = vpop.f32.mrb[0].mxu0
      %1378 = vmatprep.mubr.f32.mxu0 0.0
      %1379 = vmatmul.mubr.f32.gmra.mrb[0].mxu0 %v1163
      %v1380 = vpop.f32.mrb[0].mxu0
      %v1381 = vadd.f32 0.0, %v1380
      %v1382 = vpop.f32.mrb[0].mxu0
      %1383 = vmatprep.mubr.f32.mxu0 0.0
      %1384 = vmatmul.mubr.f32.gmra.mrb[0].mxu0 %v1166
      %v1385 = vpop.f32.mrb[0].mxu0
      %v1386 = vadd.f32 0.0, %v1385
      %v1387 = vpop.f32.mrb[0].mxu0
      %1388 = vmatprep.mubr.f32.mxu0 0.0
      %1389 = vmatmul.mubr.f32.gmra.mrb[0].mxu0 %v1169
      %v1390 = vpop.f32.mrb[0].mxu0
      %v1391 = vadd.f32 0.0, %v1390
      %v1392 = vpop.f32.mrb[0].mxu0
      %1393 = vmatprep.mubr.f32.mxu0 0.0
      %1394 = vmatmul.mubr.f32.gmra.mrb[0].mxu0 %v1172
      %v1395 = vpop.f32.mrb[0].mxu0
      %v1396 = vadd.f32 0.0, %v1395
      %v1397 = vpop.f32.mrb[0].mxu0
      %1398 = vdwg.mxu0
      %1431 = vrot.lane.b32.xlu0 %v1241, 32
      %v1432 = vpop.permute.xlu0 %1431
      %1433 = vrot.lane.b32.xlu0 %v1246, 32
      %v1434 = vpop.permute.xlu0 %1433
      %1435 = vrot.lane.b32.xlu0 %v1251, 32
      %v1436 = vpop.permute.xlu0 %1435
      %1437 = vrot.lane.b32.xlu0 %v1256, 32
      %v1438 = vpop.permute.xlu0 %1437
      %1439 = vrot.lane.b32.xlu0 %v1261, 32
      %v1440 = vpop.permute.xlu0 %1439
      %1441 = vrot.lane.b32.xlu0 %v1266, 32
      %v1442 = vpop.permute.xlu0 %1441
      %1443 = vrot.lane.b32.xlu0 %v1271, 32
      %v1444 = vpop.permute.xlu0 %1443
      %1445 = vrot.lane.b32.xlu0 %v1276, 32
      %v1446 = vpop.permute.xlu0 %1445
      %1447 = vrot.lane.b32.xlu0 %v1281, 32
      %v1448 = vpop.permute.xlu0 %1447
      %1449 = vrot.lane.b32.xlu0 %v1286, 32
      %v1450 = vpop.permute.xlu0 %1449
      %1451 = vrot.lane.b32.xlu0 %v1291, 32
      %v1452 = vpop.permute.xlu0 %1451
      %1453 = vrot.lane.b32.xlu0 %v1296, 32
      %v1454 = vpop.permute.xlu0 %1453
      %1455 = vrot.lane.b32.xlu0 %v1301, 32
      %v1456 = vpop.permute.xlu0 %1455
      %1457 = vrot.lane.b32.xlu0 %v1306, 32
      %v1458 = vpop.permute.xlu0 %1457
      %1459 = vrot.lane.b32.xlu0 %v1311, 32
      %v1460 = vpop.permute.xlu0 %1459
      %1461 = vrot.lane.b32.xlu0 %v1316, 32
      %v1462 = vpop.permute.xlu0 %1461
      %1463 = vrot.lane.b32.xlu0 %v1321, 32
      %v1464 = vpop.permute.xlu0 %1463
      %1465 = vrot.lane.b32.xlu0 %v1326, 32
      %v1466 = vpop.permute.xlu0 %1465
      %1467 = vrot.lane.b32.xlu0 %v1331, 32
      %v1468 = vpop.permute.xlu0 %1467
      %1469 = vrot.lane.b32.xlu0 %v1336, 32
      %v1470 = vpop.permute.xlu0 %1469
      %1471 = vrot.lane.b32.xlu0 %v1341, 32
      %v1472 = vpop.permute.xlu0 %1471
      %1473 = vrot.lane.b32.xlu0 %v1346, 32
      %v1474 = vpop.permute.xlu0 %1473
      %1475 = vrot.lane.b32.xlu0 %v1351, 32
      %v1476 = vpop.permute.xlu0 %1475
      %1477 = vrot.lane.b32.xlu0 %v1356, 32
      %v1478 = vpop.permute.xlu0 %1477
      %1479 = vrot.lane.b32.xlu0 %v1361, 32
      %v1480 = vpop.permute.xlu0 %1479
      %1481 = vrot.lane.b32.xlu0 %v1366, 32
      %v1482 = vpop.permute.xlu0 %1481
      %1483 = vrot.lane.b32.xlu0 %v1371, 32
      %v1484 = vpop.permute.xlu0 %1483
      %1485 = vrot.lane.b32.xlu0 %v1376, 32
      %v1486 = vpop.permute.xlu0 %1485
      %1487 = vrot.lane.b32.xlu0 %v1381, 32
      %v1488 = vpop.permute.xlu0 %1487
      %1489 = vrot.lane.b32.xlu0 %v1386, 32
      %v1490 = vpop.permute.xlu0 %1489
      %1491 = vrot.lane.b32.xlu0 %v1391, 32
      %v1492 = vpop.permute.xlu0 %1491
      %1493 = vrot.lane.b32.xlu0 %v1396, 32
      %v1494 = vpop.permute.xlu0 %1493
      %v1527 = vmul.f32 %v511, %v1432
      %v1528 = vmul.f32 %v516, %v1434
      %v1529 = vmul.f32 %v521, %v1436
      %v1530 = vmul.f32 %v526, %v1438
      %v1531 = vmul.f32 %v531, %v1440
      %v1532 = vmul.f32 %v536, %v1442
      %v1533 = vmul.f32 %v541, %v1444
      %v1534 = vmul.f32 %v546, %v1446
      %v1535 = vmul.f32 %v551, %v1448
      %v1536 = vmul.f32 %v556, %v1450
      %v1537 = vmul.f32 %v561, %v1452
      %v1538 = vmul.f32 %v566, %v1454
      %v1539 = vmul.f32 %v571, %v1456
      %v1540 = vmul.f32 %v576, %v1458
      %v1541 = vmul.f32 %v581, %v1460
      %v1542 = vmul.f32 %v586, %v1462
      %v1543 = vmul.f32 %v591, %v1464
      %v1544 = vmul.f32 %v596, %v1466
      %v1545 = vmul.f32 %v601, %v1468
      %v1546 = vmul.f32 %v606, %v1470
      %v1547 = vmul.f32 %v611, %v1472
      %v1548 = vmul.f32 %v616, %v1474
      %v1549 = vmul.f32 %v621, %v1476
      %v1550 = vmul.f32 %v626, %v1478
      %v1551 = vmul.f32 %v631, %v1480
      %v1552 = vmul.f32 %v636, %v1482
      %v1553 = vmul.f32 %v641, %v1484
      %v1554 = vmul.f32 %v646, %v1486
      %v1555 = vmul.f32 %v651, %v1488
      %v1556 = vmul.f32 %v656, %v1490
      %v1557 = vmul.f32 %v661, %v1492
      %v1558 = vmul.f32 %v666, %v1494
      %1591 = vrot.lane.b32.xlu0 %v1527, 96
      %v1592 = vpop.permute.xlu0 %1591
      %1593 = vrot.lane.b32.xlu0 %v1528, 96
      %v1594 = vpop.permute.xlu0 %1593
      %1595 = vrot.lane.b32.xlu0 %v1529, 96
      %v1596 = vpop.permute.xlu0 %1595
      %1597 = vrot.lane.b32.xlu0 %v1530, 96
      %v1598 = vpop.permute.xlu0 %1597
      %1599 = vrot.lane.b32.xlu0 %v1531, 96
      %v1600 = vpop.permute.xlu0 %1599
      %1601 = vrot.lane.b32.xlu0 %v1532, 96
      %v1602 = vpop.permute.xlu0 %1601
      %1603 = vrot.lane.b32.xlu0 %v1533, 96
      %v1604 = vpop.permute.xlu0 %1603
      %1605 = vrot.lane.b32.xlu0 %v1534, 96
      %v1606 = vpop.permute.xlu0 %1605
      %1607 = vrot.lane.b32.xlu0 %v1535, 96
      %v1608 = vpop.permute.xlu0 %1607
      %1609 = vrot.lane.b32.xlu0 %v1536, 96
      %v1610 = vpop.permute.xlu0 %1609
      %1611 = vrot.lane.b32.xlu0 %v1537, 96
      %v1612 = vpop.permute.xlu0 %1611
      %1613 = vrot.lane.b32.xlu0 %v1538, 96
      %v1614 = vpop.permute.xlu0 %1613
      %1615 = vrot.lane.b32.xlu0 %v1539, 96
      %v1616 = vpop.permute.xlu0 %1615
      %1617 = vrot.lane.b32.xlu0 %v1540, 96
      %v1618 = vpop.permute.xlu0 %1617
      %1619 = vrot.lane.b32.xlu0 %v1541, 96
      %v1620 = vpop.permute.xlu0 %1619
      %1621 = vrot.lane.b32.xlu0 %v1542, 96
      %v1622 = vpop.permute.xlu0 %1621
      %1623 = vrot.lane.b32.xlu0 %v1543, 96
      %v1624 = vpop.permute.xlu0 %1623
      %1625 = vrot.lane.b32.xlu0 %v1544, 96
      %v1626 = vpop.permute.xlu0 %1625
      %1627 = vrot.lane.b32.xlu0 %v1545, 96
      %v1628 = vpop.permute.xlu0 %1627
      %1629 = vrot.lane.b32.xlu0 %v1546, 96
      %v1630 = vpop.permute.xlu0 %1629
      %1631 = vrot.lane.b32.xlu0 %v1547, 96
      %v1632 = vpop.permute.xlu0 %1631
      %1633 = vrot.lane.b32.xlu0 %v1548, 96
      %v1634 = vpop.permute.xlu0 %1633
      %1635 = vrot.lane.b32.xlu0 %v1549, 96
      %v1636 = vpop.permute.xlu0 %1635
      %1637 = vrot.lane.b32.xlu0 %v1550, 96
      %v1638 = vpop.permute.xlu0 %1637
      %1639 = vrot.lane.b32.xlu0 %v1551, 96
      %v1640 = vpop.permute.xlu0 %1639
      %1641 = vrot.lane.b32.xlu0 %v1552, 96
      %v1642 = vpop.permute.xlu0 %1641
      %1643 = vrot.lane.b32.xlu0 %v1553, 96
      %v1644 = vpop.permute.xlu0 %1643
      %1645 = vrot.lane.b32.xlu0 %v1554, 96
      %v1646 = vpop.permute.xlu0 %1645
      %1647 = vrot.lane.b32.xlu0 %v1555, 96
      %v1648 = vpop.permute.xlu0 %1647
      %1649 = vrot.lane.b32.xlu0 %v1556, 96
      %v1650 = vpop.permute.xlu0 %1649
      %1651 = vrot.lane.b32.xlu0 %v1557, 96
      %v1652 = vpop.permute.xlu0 %1651
      %1653 = vrot.lane.b32.xlu0 %v1558, 96
      %v1654 = vpop.permute.xlu0 %1653
      %1687 = vst.msk [vmem:[%s302] sm:$0xff] %vm347, %v1592
      %1688 = vst.msk [vmem:[%s302 + $0x8] sm:$0xff] %vm347, %v1594
      %1689 = vst.msk [vmem:[%s302 + $0x10] sm:$0xff] %vm347, %v1596
      %1690 = vst.msk [vmem:[%s302 + $0x18] sm:$0xff] %vm347, %v1598
      %1691 = vst.msk [vmem:[%s302 + $0x20] sm:$0xff] %vm347, %v1600
      %1692 = vst.msk [vmem:[%s302 + $0x28] sm:$0xff] %vm347, %v1602
      %1693 = vst.msk [vmem:[%s302 + $0x30] sm:$0xff] %vm347, %v1604
      %1694 = vst.msk [vmem:[%s302 + $0x38] sm:$0xff] %vm347, %v1606
      %1695 = vst.msk [vmem:[%s302 + $0x40] sm:$0xff] %vm347, %v1608
      %1696 = vst.msk [vmem:[%s302 + $0x48] sm:$0xff] %vm347, %v1610
      %1697 = vst.msk [vmem:[%s302 + $0x50] sm:$0xff] %vm347, %v1612
      %1698 = vst.msk [vmem:[%s302 + $0x58] sm:$0xff] %vm347, %v1614
      %1699 = vst.msk [vmem:[%s302 + $0x60] sm:$0xff] %vm347, %v1616
      %1700 = vst.msk [vmem:[%s302 + $0x68] sm:$0xff] %vm347, %v1618
      %1701 = vst.msk [vmem:[%s302 + $0x70] sm:$0xff] %vm347, %v1620
      %1702 = vst.msk [vmem:[%s302 + $0x78] sm:$0xff] %vm347, %v1622
      %1703 = vst.msk [vmem:[%s302 + $0x80] sm:$0xff] %vm347, %v1624
      %1704 = vst.msk [vmem:[%s302 + $0x88] sm:$0xff] %vm347, %v1626
      %1705 = vst.msk [vmem:[%s302 + $0x90] sm:$0xff] %vm347, %v1628
      %1706 = vst.msk [vmem:[%s302 + $0x98] sm:$0xff] %vm347, %v1630
      %1707 = vst.msk [vmem:[%s302 + $0xa0] sm:$0xff] %vm347, %v1632
      %1708 = vst.msk [vmem:[%s302 + $0xa8] sm:$0xff] %vm347, %v1634
      %1709 = vst.msk [vmem:[%s302 + $0xb0] sm:$0xff] %vm347, %v1636
      %1710 = vst.msk [vmem:[%s302 + $0xb8] sm:$0xff] %vm347, %v1638
      %1711 = vst.msk [vmem:[%s302 + $0xc0] sm:$0xff] %vm347, %v1640
      %1712 = vst.msk [vmem:[%s302 + $0xc8] sm:$0xff] %vm347, %v1642
      %1713 = vst.msk [vmem:[%s302 + $0xd0] sm:$0xff] %vm347, %v1644
      %1714 = vst.msk [vmem:[%s302 + $0xd8] sm:$0xff] %vm347, %v1646
      %1715 = vst.msk [vmem:[%s302 + $0xe0] sm:$0xff] %vm347, %v1648
      %1716 = vst.msk [vmem:[%s302 + $0xe8] sm:$0xff] %vm347, %v1650
      %1717 = vst.msk [vmem:[%s302 + $0xf0] sm:$0xff] %vm347, %v1652
      %1718 = vst.msk [vmem:[%s302 + $0xf8] sm:$0xff] %vm347, %v1654
      %s1719 = smul.u32 32, %s18
      %p1720 = scmp.lt.s32.totalorder %s1719, 63
      %s1721 = scalar_select %p1720, %s1719, 63
      %s1722 = smul.addr %s1721, 8
      %s1723 = scalar_lea.vmem %s7, %s1722
      // Predicated region
      $region49: #{tpu_custom_call.1} parent=47 // pred_check
        %p1724 = pneg %p193
      $region50: #{tpu_custom_call.1} parent=47 // pred_check_branch
        %1726 = sbr.rel (%p1724) target = $region52
      $region51: #{tpu_custom_call.1} parent=47 // pred_region
        %s1727 = smul.u32 32, %s18
      $region52: #{tpu_custom_call.1} parent=47 // pred_fallthru
        _
    $region48: #{tpu_custom_call.1} parent=5 // pred_fallthru
      _
    %p1728 = scmp.le.s32.totalorder 2, %s13
    // Predicated region
    $region53: #{tpu_custom_call.1} parent=5 // pred_check
      %p1729 = pneg %p1728
    $region54: #{tpu_custom_call.1} parent=5 // pred_check_branch
      %1731 = sbr.rel (%p1729) target = $region56
    $region55: #{tpu_custom_call.1} parent=5 // pred_region
      %s1732 = ssub.s32 %s13, 2
      // Predicated region
      $region57: #{tpu_custom_call.1} parent=55 // pred_check
        %p1733 = pneg %p199
      $region58: #{tpu_custom_call.1} parent=55 // pred_check_branch
        %1735 = sbr.rel (%p1733) target = $region60
      $region59: #{tpu_custom_call.1} parent=55 // pred_region
        %s1736 = smul.u32 32, %s19
        %p1737 = scmp.lt.s32.totalorder %s1736, 63
        %s1738 = scalar_select %p1737, %s1736, 63
        %s1739 = smul.addr %s1738, 8
        %s1740 = scalar_lea.vmem %s7, %s1739
      $region60: #{tpu_custom_call.1} parent=55 // pred_fallthru
        _
    $region56: #{tpu_custom_call.1} parent=5 // pred_fallthru
      _
  $region6: #{tpu_custom_call.1} parent=0 // loop_footer
    %s17 = sadd.s32 1, %s13
  $region7: #{tpu_custom_call.1} parent=0 // loop_footer_branch
    %12 = sbr.rel target = $region3
  $region8: #{tpu_custom_call.1} parent=0 // loop_exit
    _

</llo_original>
